<compile_context>
chip_gen: v5e
topology: v5e:2x2
jax: 0.10.0
libtpu: 0.0.40
codegen_flags: <defaults>
</compile_context>

<pallas_src>
from collections import OrderedDict

import jax
import jax.numpy as jnp
from jax.experimental import pallas as pl
from jax.experimental.pallas import tpu as pltpu


# ----------------------------------------------------------------------------
# Pallas kernel: tiled pipe_driver compute stage  (y = x @ W + b)
# ----------------------------------------------------------------------------
def _linear_kernel(x_ref, w_ref, b_ref, o_ref):
    """One (tm, tn) output tile; accumulated directly in o_ref over K."""
    k = pl.program_id(2)

    @pl.when(k == 0)
    def _init():
        o_ref[...] = jnp.zeros_like(o_ref)

    # bf16 x bf16 -> f32 accumulation on the MXU.
    o_ref[...] += jnp.dot(
        x_ref[...], w_ref[...], preferred_element_type=jnp.float32
    )

    @pl.when(k == pl.num_programs(2) - 1)
    def _finalize():
        # Bias added exactly once per output tile, off the K critical path.
        o_ref[...] = o_ref[...] + b_ref[...]


def _round_up(x, m):
    return ((x + m - 1) // m) * m


def _pick_tm(M):
    """Row-tile size: collapse the grid, but keep >=2 M-blocks when M > 128
    so both TensorCores on v7x get work via the 'parallel' grid axis."""
    if M <= 128:
        return M            # equals full dim -> satisfies (8,128) tiling rule
    if M <= 512:
        return _round_up(-(-M // 2), 128)   # two tiles
    return 256


def make_linear_pipe_driver(w, b):
    """Build a jitted Pallas-backed pipe_driver stage with cached weights.

    w: [H_in, H_out] f32, b: [1, H_out] f32.
    Returns fwd(x): [B, H_in] f32 -> [B, H_out] f32 (bf16 MXU inputs, f32 acc).
    """
    K, N = w.shape

    # Lane-dense tiles, capped at 512 (fits VMEM with headroom on all gens,
    # including v7x's 64 MiB physical / 32 MiB scoped default).
    tn = min(512, _round_up(N, 128))
    tk = min(512, _round_up(K, 128))
    Kp = _round_up(K, tk)

    # Hoisted, cached weight/bias prep (static across forwards).
    wb = w.astype(jnp.bfloat16)
    if Kp != K:
        # K must be zero-padded: garbage K columns would corrupt valid outputs.
        wb = jnp.pad(wb, ((0, Kp - K), (0, 0)))
    bb = b.astype(jnp.float32)

    @jax.jit
    def fwd(x):
        M = x.shape[0]
        tm = _pick_tm(M)

        xb = x.astype(jnp.bfloat16)
        if Kp != K:
            xb = jnp.pad(xb, ((0, 0), (0, Kp - K)))

        grid = (pl.cdiv(M, tm), pl.cdiv(N, tn), Kp // tk)

        cost = pl.CostEstimate(
            flops=2 * M * N * Kp,
            transcendentals=0,
            bytes_accessed=(M * Kp * 2) + (Kp * N * 2) + (N * 4) + (M * N * 4),
        )

        return pl.pallas_call(
            _linear_kernel,
            out_shape=jax.ShapeDtypeStruct((M, N), jnp.float32),
            grid=grid,
            in_specs=[
                pl.BlockSpec((tm, tk), lambda i, j, k: (i, k)),  # activations
                pl.BlockSpec((tk, tn), lambda i, j, k: (k, j)),  # weights
                pl.BlockSpec((1, tn), lambda i, j, k: (0, j)),   # bias
            ],
            out_specs=pl.BlockSpec((tm, tn), lambda i, j, k: (i, j)),
            compiler_params=pltpu.CompilerParams(
                dimension_semantics=("parallel", "parallel", "arbitrary"),
            ),
            cost_estimate=cost,
        )(xb, wb, bb)

    return fwd


# ----------------------------------------------------------------------------
# DeviceSafeDriver wrapper (JAX version)
# ----------------------------------------------------------------------------
class DeviceSafeDriver:
    """JAX/Pallas port of atorch's DeviceSafeDriver.

    Args:
        pipe_driver: callable taking device arrays (the Pallas-backed stage).
        device: the jax.Device inputs must live on.
        pipe_ranks: kept for API parity (single-process here).
        forward_keys: optional ordering of kwargs.
    """

    def __init__(self, pipe_driver, device, pipe_ranks, forward_keys=None):
        self.pipe_driver = pipe_driver
        self.device = device
        self.pipe_ranks = pipe_ranks
        self.forward_keys = forward_keys

    def _lower_tensor_to_device(self, input_):
        if isinstance(input_, jax.Array):
            # Mirrors `input_.to(self.device)`.
            return jax.device_put(input_, self.device)
        if isinstance(input_, jax.ShapeDtypeStruct):
            # Mirrors the "meta tensor" branch: materialize random data of the
            # same shape/dtype on the target device.
            rnd = jax.random.uniform(
                jax.random.PRNGKey(0), input_.shape, dtype=jnp.float32
            ).astype(input_.dtype)
            return jax.device_put(rnd, self.device)
        return input_

    def __call__(self, *args, **kwargs):
        args = tuple(self._lower_tensor_to_device(a) for a in args)
        kwargs = {k: self._lower_tensor_to_device(v) for k, v in kwargs.items()}
        if self.forward_keys is not None and len(kwargs) > 0:
            kwargs = OrderedDict(
                (k, kwargs[k]) for k in self.forward_keys if k in kwargs
            )
        return (
            self.pipe_driver(*args, **kwargs.values())
            if kwargs
            else self.pipe_driver(*args)
        )


# ----------------------------------------------------------------------------
# main
# ----------------------------------------------------------------------------
if __name__ == "__main__":
    key = jax.random.PRNGKey(0)
    kx, kw, kb = jax.random.split(key, 3)

    # Lane/MXU-aligned shapes; tiles collapse the grid to (2, 1, 1):
    # tm=128 (two M-blocks for v7x dual-TC), tn=tk=512.
    B, H_IN, H_OUT = 256, 512, 512

    x = jax.random.normal(kx, (B, H_IN), dtype=jnp.float32)
    w = (
        jax.random.normal(kw, (H_IN, H_OUT), dtype=jnp.float32)
        * (1.0 / jnp.sqrt(H_IN))
    )
    b = jax.random.normal(kb, (1, H_OUT), dtype=jnp.float32) * 0.01

    # Weights cast/padded once and cached inside the jitted pipe_driver.
    pipe_driver_fn = make_linear_pipe_driver(w, b)

    device = jax.devices()[0]
    driver = DeviceSafeDriver(
        pipe_driver_fn, device, pipe_ranks=[0], forward_keys=None
    )

    out = jax.block_until_ready(driver(x))

    # Correctness check against a plain-JAX reference of the same bf16-input /
    # f32-accumulation computation.
    ref = (
        jnp.dot(
            x.astype(jnp.bfloat16),
            w.astype(jnp.bfloat16),
            preferred_element_type=jnp.float32,
        )
        + b
    )
    assert out.shape == (B, H_OUT)
    assert jnp.allclose(out, ref, atol=1e-2, rtol=1e-2), (
        float(jnp.max(jnp.abs(out - ref)))
    )

    # Also exercise the "meta tensor" path (ShapeDtypeStruct placeholder).
    meta_in = jax.ShapeDtypeStruct((B, H_IN), jnp.float32)
    out_meta = jax.block_until_ready(driver(meta_in))
    assert out_meta.shape == (B, H_OUT)

    print("KERNEL_OK")
</pallas_src>

<mosaic_0001>
module attributes {stable_mosaic.version = 11 : i64} {
  func.func @_linear_kernel(%arg0: i32, %arg1: i32, %arg2: i32, %arg3: memref<128x512xbf16, #tpu.memory_space<vmem>>, %arg4: memref<512x512xbf16, #tpu.memory_space<vmem>>, %arg5: memref<1x512xf32, #tpu.memory_space<vmem>>, %arg6: memref<128x512xf32, #tpu.memory_space<vmem>>) attributes {dimension_semantics = [#tpu.dimension_semantics<parallel>, #tpu.dimension_semantics<parallel>, #tpu.dimension_semantics<arbitrary>], iteration_bounds = array<i64: 2, 1, 1>, scalar_prefetch = 0 : i64, scratch_operands = 0 : i64, tpu.core_type = #tpu.core_type<tc>, window_params = [{transform_indices = @transform_0, window_bounds = array<i64: 128, 512>}, {transform_indices = @transform_1, window_bounds = array<i64: 512, 512>}, {transform_indices = @transform_2, window_bounds = array<i64: 1, 512>}, {transform_indices = @transform_3, window_bounds = array<i64: 128, 512>}]} {
    %c0_i32 = arith.constant 0 : i32
    %0 = arith.cmpi eq, %arg2, %c0_i32 : i32
    %1 = arith.extui %0 : i1 to i32
    %c0_i32_0 = arith.constant 0 : i32
    %2 = arith.cmpi ne, %1, %c0_i32_0 : i32
    scf.if %2 {
      %cst_10 = arith.constant 0.000000e+00 : f32
      %12 = vector.broadcast %cst_10 : f32 to vector<128x512xf32>
      %c0_11 = arith.constant 0 : index
      %c0_12 = arith.constant 0 : index
      %13 = vector.load %arg6[%c0_11, %c0_12] : memref<128x512xf32, #tpu.memory_space<vmem>>, vector<128x512xf32>
      tpu.vector_store %arg6[%c0_11, %c0_12], %12 {strides = array<i32>} : memref<128x512xf32, #tpu.memory_space<vmem>>, vector<128x512xf32>,
    } else {
    }
    %c0 = arith.constant 0 : index
    %c0_1 = arith.constant 0 : index
    %3 = vector.load %arg6[%c0, %c0_1] : memref<128x512xf32, #tpu.memory_space<vmem>>, vector<128x512xf32>
    %c0_2 = arith.constant 0 : index
    %c0_3 = arith.constant 0 : index
    %4 = vector.load %arg3[%c0_2, %c0_3] : memref<128x512xbf16, #tpu.memory_space<vmem>>, vector<128x512xbf16>
    %c0_4 = arith.constant 0 : index
    %c0_5 = arith.constant 0 : index
    %5 = vector.load %arg4[%c0_4, %c0_5] : memref<512x512xbf16, #tpu.memory_space<vmem>>, vector<512x512xbf16>
    %cst = arith.constant dense<0.000000e+00> : vector<128x512xf32>
    %6 = tpu.matmul %4, %5, %cst {dimension_numbers = #tpu.dot_dimension_numbers<[1], [0], [0], [1], [0, 0, 1, 1], [], []>} : vector<128x512xbf16>, vector<512x512xbf16>, vector<128x512xf32> -> vector<128x512xf32>
    %7 = arith.addf %3, %6 : vector<128x512xf32>
    %c0_6 = arith.constant 0 : index
    %c0_7 = arith.constant 0 : index
    %8 = vector.load %arg6[%c0_6, %c0_7] : memref<128x512xf32, #tpu.memory_space<vmem>>, vector<128x512xf32>
    tpu.vector_store %arg6[%c0_6, %c0_7], %7 {strides = array<i32>} : memref<128x512xf32, #tpu.memory_space<vmem>>, vector<128x512xf32>,
    %c0_i32_8 = arith.constant 0 : i32
    %9 = arith.cmpi eq, %arg2, %c0_i32_8 : i32
    %10 = arith.extui %9 : i1 to i32
    %c0_i32_9 = arith.constant 0 : i32
    %11 = arith.cmpi ne, %10, %c0_i32_9 : i32
    scf.if %11 {
      %c0_10 = arith.constant 0 : index
      %c0_11 = arith.constant 0 : index
      %12 = vector.load %arg6[%c0_10, %c0_11] : memref<128x512xf32, #tpu.memory_space<vmem>>, vector<128x512xf32>
      %c0_12 = arith.constant 0 : index
      %c0_13 = arith.constant 0 : index
      %13 = vector.load %arg5[%c0_12, %c0_13] : memref<1x512xf32, #tpu.memory_space<vmem>>, vector<1x512xf32>
      %14 = vector.broadcast %13 : vector<1x512xf32> to vector<128x512xf32>
      %15 = arith.addf %12, %14 : vector<128x512xf32>
      %c0_14 = arith.constant 0 : index
      %c0_15 = arith.constant 0 : index
      %16 = vector.load %arg6[%c0_14, %c0_15] : memref<128x512xf32, #tpu.memory_space<vmem>>, vector<128x512xf32>
      tpu.vector_store %arg6[%c0_14, %c0_15], %15 {strides = array<i32>} : memref<128x512xf32, #tpu.memory_space<vmem>>, vector<128x512xf32>,
    } else {
    }
    return
  }
  func.func @transform_0(%arg0: i32, %arg1: i32, %arg2: i32) -> (i32, i32) {
    %c0_i32 = arith.constant 0 : i32
    return %arg0, %arg2 : i32, i32
  }
  func.func @transform_1(%arg0: i32, %arg1: i32, %arg2: i32) -> (i32, i32) {
    %c0_i32 = arith.constant 0 : i32
    return %arg2, %arg1 : i32, i32
  }
  func.func @transform_2(%arg0: i32, %arg1: i32, %arg2: i32) -> (i32, i32) {
    %c0_i32 = arith.constant 0 : i32
    %c0_i32_0 = arith.constant 0 : i32
    return %c0_i32, %arg1 : i32, i32
  }
  func.func @transform_3(%arg0: i32, %arg1: i32, %arg2: i32) -> (i32, i32) {
    %c0_i32 = arith.constant 0 : i32
    return %arg0, %arg1 : i32, i32
  }
}

</mosaic_0001>

<llo_original>
// kernel: fwd.1
$region0: #{fwd.1}
  #allocation0 [shape = 'u32[]', space=smem, size = 0x4, offset = 0x4, fixed_abs, tag = 'smem constant byte address 0x4 - core index']
  #allocation1 [shape = 'u32[72,128]{1,0:T(1,128)}', space=vmem, size = 0x9000, scoped, tag = 'internal scratch']
  %s0 = inlined_call_operand.vmem [shape: bf16[256,512], index: 0, kind: input, shape index: {}]
  %s1 = inlined_call_operand.vmem [shape: bf16[512,512], index: 1, kind: input, shape index: {}]
  %s2 = inlined_call_operand.vmem [shape: f32[1,512], index: 2, kind: input, shape index: {}]
  %s3 = inlined_call_operand.hbm [shape: f32[256,512], index: 3, kind: output, shape index: {}]
  %s4 = sld [smem:[#allocation0]]
  $region53: #{fwd.1} parent=0
    _
  %s6 = ssub.s32 1, %s4
  %s7 = scalar_select 0, %s6, %s4
  $region1: #{fwd.1} parent=0
    #allocation2 [shape = 'u8[524288]{0}', space=vmem, size = 0x80000, scoped, tag = 'output window, operand 0']
    #allocation3 [shape = 's32[2]{0}', space=sflag, size = 0x8, scoped, tag = 'scoped memory for fwd.1']
    %8 = vsyncpa [#allocation3], 0
    %s9 = scalar_lea.sflag [#allocation3], 1
    %10 = vsyncpa %s9, 0
    loop: start=0, step=1, limit=4
    $region2: #{fwd.1} parent=1 // loop_pre_header
      _
    $region3: #{fwd.1} parent=1 // loop_header
      %s12 = sphi 0, %s16
      %p13 = scmp.ge.s32.totalorder %s12, 4
      %s19 = sphi 0, %s38
      %s20 = sphi 0, %s34
      %s21 = sphi 0, %s30
      %s22 = sphi 0, %s19
      %s23 = sphi 0, %s20
      %s24 = sphi 0, %s21
      %s25 = sphi 0, %s22
      %s26 = sphi 0, %s23
      %s27 = sphi 0, %s24
      %s43 = sphi 0, %s45
      %s46 = sphi 0, %s43
      %s47 = sphi 0, %s46
      %s63 = sphi 0, %s47
      %s71 = sphi 0, %s73
      %s74 = sphi 0, %s71
      %s75 = sphi 0, %s74
      %s91 = sphi 0, %s75
      %s97 = sphi 0, %s99
      %s100 = sphi 0, %s97
      %s101 = sphi 0, %s100
      %s117 = sphi 0, %s101
      %s125 = sphi 0, %s127
      %s128 = sphi 0, %s125
      %s129 = sphi 0, %s128
      %s145 = sphi 0, %s129
    $region4: #{fwd.1} parent=1 // loop_header_branch
      %15 = sbr.rel (%p13) target = $region8
    $region5: #{fwd.1} parent=1 // loop_body
      %s17 = ssub.s32 %s12, 1
      %s18 = ssub.s32 %s12, 2
      %s28 = sadd.s32 1, %s21
      %p29 = scmp.ge.s32.totalorder %s28, 1
      %s30 = scalar_select %p29, 0, %s28
      %s31 = sadd.s32 1, %s20
      %s32 = scalar_select %p29, %s31, %s20
      %p33 = scmp.ge.s32.totalorder %s32, 1
      %s34 = scalar_select %p33, 0, %s32
      %s35 = sadd.s32 1, %s19
      %s36 = scalar_select %p33, %s35, %s19
      %p37 = scmp.ge.s32.totalorder %s36, 2
      %s38 = scalar_select %p37, 0, %s36
      %s39 = ssub.s32 %s19, %s38
      %s40 = ssub.s32 %s21, %s30
      %s41 = sor.u32 %s39, %s40
      %p42 = scmp.eq.s32.totalorder %s41, 0
      %s44 = sadd.s32 %s43, 1
      %s45 = scalar_select %p42, %s43, %s44
      %p48 = pneg %p42
      %p49 = scmp.eq.s32.totalorder %s12, 1
      %p50 = por %p48, %p49
      %p51 = scmp.ne.s32.totalorder %s43, %s46
      %p52 = scmp.eq.s32.totalorder %s12, 0
      %p53 = por %p51, %p52
      %p54 = scmp.ne.s32.totalorder %s43, %s46
      %p55 = scmp.eq.s32.totalorder %s17, 1
      %p56 = por %p54, %p55
      %p57 = scmp.ne.s32.totalorder %s46, %s47
      %p58 = scmp.eq.s32.totalorder %s17, 0
      %p59 = por %p57, %p58
      %p60 = scmp.ne.s32.totalorder %s46, %s47
      %p61 = scmp.eq.s32.totalorder %s18, 1
      %p62 = por %p60, %p61
      %p64 = scmp.ne.s32.totalorder %s47, %s63
      %p65 = scmp.eq.s32.totalorder %s18, 0
      %p66 = por %p64, %p65
      %s67 = ssub.s32 %s21, %s30
      %s68 = ssub.s32 %s20, %s34
      %s69 = sor.u32 %s67, %s68
      %p70 = scmp.eq.s32.totalorder %s69, 0
      %s72 = sadd.s32 %s71, 1
      %s73 = scalar_select %p70, %s71, %s72
      %p76 = pneg %p70
      %p77 = scmp.eq.s32.totalorder %s12, 1
      %p78 = por %p76, %p77
      %p79 = scmp.ne.s32.totalorder %s71, %s74
      %p80 = scmp.eq.s32.totalorder %s12, 0
      %p81 = por %p79, %p80
      %p82 = scmp.ne.s32.totalorder %s71, %s74
      %p83 = scmp.eq.s32.totalorder %s17, 1
      %p84 = por %p82, %p83
      %p85 = scmp.ne.s32.totalorder %s74, %s75
      %p86 = scmp.eq.s32.totalorder %s17, 0
      %p87 = por %p85, %p86
      %p88 = scmp.ne.s32.totalorder %s74, %s75
      %p89 = scmp.eq.s32.totalorder %s18, 1
      %p90 = por %p88, %p89
      %p92 = scmp.ne.s32.totalorder %s75, %s91
      %p93 = scmp.eq.s32.totalorder %s18, 0
      %p94 = por %p92, %p93
      %s95 = ssub.s32 %s20, %s34
      %p96 = scmp.eq.s32.totalorder %s95, 0
      %s98 = sadd.s32 %s97, 1
      %s99 = scalar_select %p96, %s97, %s98
      %p102 = pneg %p96
      %p103 = scmp.eq.s32.totalorder %s12, 1
      %p104 = por %p102, %p103
      %p105 = scmp.ne.s32.totalorder %s97, %s100
      %p106 = scmp.eq.s32.totalorder %s12, 0
      %p107 = por %p105, %p106
      %p108 = scmp.ne.s32.totalorder %s97, %s100
      %p109 = scmp.eq.s32.totalorder %s17, 1
      %p110 = por %p108, %p109
      %p111 = scmp.ne.s32.totalorder %s100, %s101
      %p112 = scmp.eq.s32.totalorder %s17, 0
      %p113 = por %p111, %p112
      %p114 = scmp.ne.s32.totalorder %s100, %s101
      %p115 = scmp.eq.s32.totalorder %s18, 1
      %p116 = por %p114, %p115
      %p118 = scmp.ne.s32.totalorder %s101, %s117
      %p119 = scmp.eq.s32.totalorder %s18, 0
      %p120 = por %p118, %p119
      %s121 = ssub.s32 %s19, %s38
      %s122 = ssub.s32 %s20, %s34
      %s123 = sor.u32 %s121, %s122
      %p124 = scmp.eq.s32.totalorder %s123, 0
      %s126 = sadd.s32 %s125, 1
      %s127 = scalar_select %p124, %s125, %s126
      %p130 = pneg %p124
      %p131 = scmp.eq.s32.totalorder %s12, 1
      %p132 = por %p130, %p131
      %p133 = scmp.ne.s32.totalorder %s125, %s128
      %p134 = scmp.eq.s32.totalorder %s12, 0
      %p135 = por %p133, %p134
      %p136 = scmp.ne.s32.totalorder %s125, %s128
      %p137 = scmp.eq.s32.totalorder %s17, 1
      %p138 = por %p136, %p137
      %p139 = scmp.ne.s32.totalorder %s128, %s129
      %p140 = scmp.eq.s32.totalorder %s17, 0
      %p141 = por %p139, %p140
      %p142 = scmp.ne.s32.totalorder %s128, %s129
      %p143 = scmp.eq.s32.totalorder %s18, 1
      %p144 = por %p142, %p143
      %p146 = scmp.ne.s32.totalorder %s129, %s145
      %p147 = scmp.eq.s32.totalorder %s18, 0
      %p148 = por %p146, %p147
      %p149 = scmp.le.s32.totalorder 1, %s12
      %p150 = scmp.lt.s32.totalorder %s12, 3
      %p151 = pnand %p149, %p150
      %p152 = pneg %p151
      // Predicated region
      $region9: #{fwd.1} parent=5 // pred_check
        _
      $region10: #{fwd.1} parent=5 // pred_check_branch
        %154 = sbr.rel (%p151) target = $region12
      $region11: #{fwd.1} parent=5 // pred_region
        %s155 = ssub.s32 %s12, 1
        // Predicated region
        $region13: #{fwd.1} parent=11 // pred_check
          %p156 = pneg %p87
        $region14: #{fwd.1} parent=11 // pred_check_branch
          %158 = sbr.rel (%p156) target = $region16
        $region15: #{fwd.1} parent=11 // pred_region
          %s159 = smul.u32 64, %s24
          %s160 = smul.u32 4, %s23
          %p161 = scmp.lt.s32.totalorder %s159, 63
          %s162 = scalar_select %p161, %s159, 63
          %p163 = scmp.lt.s32.totalorder %s160, 3
          %s164 = scalar_select %p163, %s160, 3
          %s165 = smul.addr %s162, 4
          %s166 = sadd.s32 %s164, %s165
          %s167 = smul.addr %s166, 4
          %s168 = scalar_lea.vmem %s1, %s167
          %s169 = smul.u32 64, %s24
          %s170 = smul.u32 4, %s23
        $region16: #{fwd.1} parent=11 // pred_fallthru
          _
        // Predicated region
        $region17: #{fwd.1} parent=11 // pred_check
          %p171 = pneg %p113
        $region18: #{fwd.1} parent=11 // pred_check_branch
          %173 = sbr.rel (%p171) target = $region20
        $region19: #{fwd.1} parent=11 // pred_region
          %s174 = smul.u32 4, %s23
          %p175 = scmp.lt.s32.totalorder %s174, 3
          %s176 = scalar_select %p175, %s174, 3
          %s177 = scalar_lea.vmem %s2, %s176
          %s178 = smul.u32 4, %s23
        $region20: #{fwd.1} parent=11 // pred_fallthru
          _
      $region12: #{fwd.1} parent=5 // pred_fallthru
        _
      %p179 = scmp.lt.s32.totalorder %s12, 2
      // Predicated region
      $region21: #{fwd.1} parent=5 // pred_check
        %p180 = pneg %p179
      $region22: #{fwd.1} parent=5 // pred_check_branch
        %182 = sbr.rel (%p180) target = $region24
      $region23: #{fwd.1} parent=5 // pred_region
        // Predicated region
        $region25: #{fwd.1} parent=23 // pred_check
          %p183 = pneg %p53
        $region26: #{fwd.1} parent=23 // pred_check_branch
          %185 = sbr.rel (%p183) target = $region28
        $region27: #{fwd.1} parent=23 // pred_region
          %s186 = smul.u32 16, %s19
          %s187 = smul.u32 4, %s21
          %p188 = scmp.lt.s32.totalorder %s186, 31
          %s189 = scalar_select %p188, %s186, 31
          %p190 = scmp.lt.s32.totalorder %s187, 3
          %s191 = scalar_select %p190, %s187, 3
          %s192 = smul.addr %s189, 4
          %s193 = sadd.s32 %s191, %s192
          %s194 = smul.addr %s193, 4
          %s195 = scalar_lea.vmem %s0, %s194
          %s196 = smul.u32 16, %s19
          %s197 = smul.u32 4, %s21
        $region28: #{fwd.1} parent=23 // pred_fallthru
          _
      $region24: #{fwd.1} parent=5 // pred_fallthru
        _
      %p198 = scmp.le.s32.totalorder 1, %s12
      %p199 = scmp.lt.s32.totalorder %s12, 3
      %p200 = pnand %p198, %p199
      %p201 = pneg %p200
      // Predicated region
      $region29: #{fwd.1} parent=5 // pred_check
        _
      $region30: #{fwd.1} parent=5 // pred_check_branch
        %203 = sbr.rel (%p200) target = $region32
      $region31: #{fwd.1} parent=5 // pred_region
        %s204 = ssub.s32 %s12, 1
        %s205 = smul.u32 16, %s22
        %s206 = smul.u32 4, %s24
        %p207 = scmp.lt.s32.totalorder %s205, 31
        %s208 = scalar_select %p207, %s205, 31
        %p209 = scmp.lt.s32.totalorder %s206, 3
        %s210 = scalar_select %p209, %s206, 3
        %s211 = smul.addr %s208, 4
        %s212 = sadd.s32 %s210, %s211
        %s213 = smul.addr %s212, 4
        %s214 = scalar_lea.vmem %s0, %s213
        %p215 = pneg %p59
        %p216 = pneg %p56
        %s217 = smul.u32 64, %s24
        %s218 = smul.u32 4, %s23
        %p219 = scmp.lt.s32.totalorder %s217, 63
        %s220 = scalar_select %p219, %s217, 63
        %p221 = scmp.lt.s32.totalorder %s218, 3
        %s222 = scalar_select %p221, %s218, 3
        %s223 = smul.addr %s220, 4
        %s224 = sadd.s32 %s222, %s223
        %s225 = smul.addr %s224, 4
        %s226 = scalar_lea.vmem %s1, %s225
        %p227 = pneg %p87
        %p228 = pneg %p84
        %s229 = smul.u32 4, %s23
        %p230 = scmp.lt.s32.totalorder %s229, 3
        %s231 = scalar_select %p230, %s229, 3
        %s232 = scalar_lea.vmem %s2, %s231
        %p233 = pneg %p113
        %p234 = pneg %p110
        %p235 = pneg %p141
        %p236 = pneg %p138
        %s237 = sand.u32 %s128, 1
        %s238 = scalar_lea.sflag [#allocation3], %s237
        %s239 = sand.u32 %s128, 1
        %s240 = smul.addr %s239, 512
        %s241 = scalar_lea.vmem [#allocation2], %s240
        %s242 = smul.u32 16, %s22
        %s243 = smul.u32 4, %s24
        %p244 = scmp.lt.s32.totalorder %s242, 31
        %s245 = scalar_select %p244, %s242, 31
        %p246 = scmp.lt.s32.totalorder %s243, 3
        %s247 = scalar_select %p246, %s243, 3
        %s248 = smul.addr %s245, 4
        %s249 = sadd.s32 %s247, %s248
        %s250 = smul.addr %s249, 4
        %s251 = scalar_lea.vmem %s0, %s250
        %s252 = smul.u32 16, %s22
        %s253 = smul.u32 4, %s24
        %s254 = smul.u32 64, %s24
        %s255 = smul.u32 4, %s23
        %p256 = scmp.lt.s32.totalorder %s254, 63
        %s257 = scalar_select %p256, %s254, 63
        %p258 = scmp.lt.s32.totalorder %s255, 3
        %s259 = scalar_select %p258, %s255, 3
        %s260 = smul.addr %s257, 4
        %s261 = sadd.s32 %s259, %s260
        %s262 = smul.addr %s261, 4
        %s263 = scalar_lea.vmem %s1, %s262
        %s264 = smul.u32 64, %s24
        %s265 = smul.u32 4, %s23
        %s266 = smul.u32 4, %s23
        %p267 = scmp.lt.s32.totalorder %s266, 3
        %s268 = scalar_select %p267, %s266, 3
        %s269 = scalar_lea.vmem %s2, %s268
        %s270 = smul.u32 4, %s23
        %s271 = smul.u32 16, %s22
        %s272 = smul.u32 4, %s23
        %p273 = scmp.eq.s32.totalorder %s24, 0
        // Predicated region
        $region33: #{fwd.1} parent=31 // pred_check
          %p274 = pneg %p273
        $region34: #{fwd.1} parent=31 // pred_check_branch
          %276 = sbr.rel (%p274) target = $region36
        $region35: #{fwd.1} parent=31 // pred_region
          %277 = vst [vmem:[%s241] sm:$0xff] 0.0
          %278 = vst [vmem:[%s241 + $0x8] sm:$0xff] 0.0
          %279 = vst [vmem:[%s241 + $0x10] sm:$0xff] 0.0
          %280 = vst [vmem:[%s241 + $0x18] sm:$0xff] 0.0
          %281 = vst [vmem:[%s241 + $0x20] sm:$0xff] 0.0
          %282 = vst [vmem:[%s241 + $0x28] sm:$0xff] 0.0
          %283 = vst [vmem:[%s241 + $0x30] sm:$0xff] 0.0
          %284 = vst [vmem:[%s241 + $0x38] sm:$0xff] 0.0
          %285 = vst [vmem:[%s241 + $0x40] sm:$0xff] 0.0
          %286 = vst [vmem:[%s241 + $0x48] sm:$0xff] 0.0
          %287 = vst [vmem:[%s241 + $0x50] sm:$0xff] 0.0
          %288 = vst [vmem:[%s241 + $0x58] sm:$0xff] 0.0
          %289 = vst [vmem:[%s241 + $0x60] sm:$0xff] 0.0
          %290 = vst [vmem:[%s241 + $0x68] sm:$0xff] 0.0
          %291 = vst [vmem:[%s241 + $0x70] sm:$0xff] 0.0
          %292 = vst [vmem:[%s241 + $0x78] sm:$0xff] 0.0
          %293 = vst [vmem:[%s241 + $0x80] sm:$0xff] 0.0
          %294 = vst [vmem:[%s241 + $0x88] sm:$0xff] 0.0
          %295 = vst [vmem:[%s241 + $0x90] sm:$0xff] 0.0
          %296 = vst [vmem:[%s241 + $0x98] sm:$0xff] 0.0
          %297 = vst [vmem:[%s241 + $0xa0] sm:$0xff] 0.0
          %298 = vst [vmem:[%s241 + $0xa8] sm:$0xff] 0.0
          %299 = vst [vmem:[%s241 + $0xb0] sm:$0xff] 0.0
          %300 = vst [vmem:[%s241 + $0xb8] sm:$0xff] 0.0
          %301 = vst [vmem:[%s241 + $0xc0] sm:$0xff] 0.0
          %302 = vst [vmem:[%s241 + $0xc8] sm:$0xff] 0.0
          %303 = vst [vmem:[%s241 + $0xd0] sm:$0xff] 0.0
          %304 = vst [vmem:[%s241 + $0xd8] sm:$0xff] 0.0
          %305 = vst [vmem:[%s241 + $0xe0] sm:$0xff] 0.0
          %306 = vst [vmem:[%s241 + $0xe8] sm:$0xff] 0.0
          %307 = vst [vmem:[%s241 + $0xf0] sm:$0xff] 0.0
          %308 = vst [vmem:[%s241 + $0xf8] sm:$0xff] 0.0
          %309 = vst [vmem:[%s241 + $0x100] sm:$0xff] 0.0
          %310 = vst [vmem:[%s241 + $0x108] sm:$0xff] 0.0
          %311 = vst [vmem:[%s241 + $0x110] sm:$0xff] 0.0
          %312 = vst [vmem:[%s241 + $0x118] sm:$0xff] 0.0
          %313 = vst [vmem:[%s241 + $0x120] sm:$0xff] 0.0
          %314 = vst [vmem:[%s241 + $0x128] sm:$0xff] 0.0
          %315 = vst [vmem:[%s241 + $0x130] sm:$0xff] 0.0
          %316 = vst [vmem:[%s241 + $0x138] sm:$0xff] 0.0
          %317 = vst [vmem:[%s241 + $0x140] sm:$0xff] 0.0
          %318 = vst [vmem:[%s241 + $0x148] sm:$0xff] 0.0
          %319 = vst [vmem:[%s241 + $0x150] sm:$0xff] 0.0
          %320 = vst [vmem:[%s241 + $0x158] sm:$0xff] 0.0
          %321 = vst [vmem:[%s241 + $0x160] sm:$0xff] 0.0
          %322 = vst [vmem:[%s241 + $0x168] sm:$0xff] 0.0
          %323 = vst [vmem:[%s241 + $0x170] sm:$0xff] 0.0
          %324 = vst [vmem:[%s241 + $0x178] sm:$0xff] 0.0
          %325 = vst [vmem:[%s241 + $0x180] sm:$0xff] 0.0
          %326 = vst [vmem:[%s241 + $0x188] sm:$0xff] 0.0
          %327 = vst [vmem:[%s241 + $0x190] sm:$0xff] 0.0
          %328 = vst [vmem:[%s241 + $0x198] sm:$0xff] 0.0
          %329 = vst [vmem:[%s241 + $0x1a0] sm:$0xff] 0.0
          %330 = vst [vmem:[%s241 + $0x1a8] sm:$0xff] 0.0
          %331 = vst [vmem:[%s241 + $0x1b0] sm:$0xff] 0.0
          %332 = vst [vmem:[%s241 + $0x1b8] sm:$0xff] 0.0
          %333 = vst [vmem:[%s241 + $0x1c0] sm:$0xff] 0.0
          %334 = vst [vmem:[%s241 + $0x1c8] sm:$0xff] 0.0
          %335 = vst [vmem:[%s241 + $0x1d0] sm:$0xff] 0.0
          %336 = vst [vmem:[%s241 + $0x1d8] sm:$0xff] 0.0
          %337 = vst [vmem:[%s241 + $0x1e0] sm:$0xff] 0.0
          %338 = vst [vmem:[%s241 + $0x1e8] sm:$0xff] 0.0
          %339 = vst [vmem:[%s241 + $0x1f0] sm:$0xff] 0.0
          %340 = vst [vmem:[%s241 + $0x1f8] sm:$0xff] 0.0
        $region36: #{fwd.1} parent=31 // pred_fallthru
          _
        %v341 = vld [vmem:[%s241] sm:$0xff]
        %v342 = vld [vmem:[%s241 + $0x8] sm:$0xff]
        %v343 = vld [vmem:[%s241 + $0x10] sm:$0xff]
        %v344 = vld [vmem:[%s241 + $0x18] sm:$0xff]
        %v345 = vld [vmem:[%s241 + $0x20] sm:$0xff]
        %v346 = vld [vmem:[%s241 + $0x28] sm:$0xff]
        %v347 = vld [vmem:[%s241 + $0x30] sm:$0xff]
        %v348 = vld [vmem:[%s241 + $0x38] sm:$0xff]
        %v349 = vld [vmem:[%s241 + $0x40] sm:$0xff]
        %v350 = vld [vmem:[%s241 + $0x48] sm:$0xff]
        %v351 = vld [vmem:[%s241 + $0x50] sm:$0xff]
        %v352 = vld [vmem:[%s241 + $0x58] sm:$0xff]
        %v353 = vld [vmem:[%s241 + $0x60] sm:$0xff]
        %v354 = vld [vmem:[%s241 + $0x68] sm:$0xff]
        %v355 = vld [vmem:[%s241 + $0x70] sm:$0xff]
        %v356 = vld [vmem:[%s241 + $0x78] sm:$0xff]
        %v357 = vld [vmem:[%s241 + $0x80] sm:$0xff]
        %v358 = vld [vmem:[%s241 + $0x88] sm:$0xff]
        %v359 = vld [vmem:[%s241 + $0x90] sm:$0xff]
        %v360 = vld [vmem:[%s241 + $0x98] sm:$0xff]
        %v361 = vld [vmem:[%s241 + $0xa0] sm:$0xff]
        %v362 = vld [vmem:[%s241 + $0xa8] sm:$0xff]
        %v363 = vld [vmem:[%s241 + $0xb0] sm:$0xff]
        %v364 = vld [vmem:[%s241 + $0xb8] sm:$0xff]
        %v365 = vld [vmem:[%s241 + $0xc0] sm:$0xff]
        %v366 = vld [vmem:[%s241 + $0xc8] sm:$0xff]
        %v367 = vld [vmem:[%s241 + $0xd0] sm:$0xff]
        %v368 = vld [vmem:[%s241 + $0xd8] sm:$0xff]
        %v369 = vld [vmem:[%s241 + $0xe0] sm:$0xff]
        %v370 = vld [vmem:[%s241 + $0xe8] sm:$0xff]
        %v371 = vld [vmem:[%s241 + $0xf0] sm:$0xff]
        %v372 = vld [vmem:[%s241 + $0xf8] sm:$0xff]
        %v373 = vld [vmem:[%s241 + $0x100] sm:$0xff]
        %v374 = vld [vmem:[%s241 + $0x108] sm:$0xff]
        %v375 = vld [vmem:[%s241 + $0x110] sm:$0xff]
        %v376 = vld [vmem:[%s241 + $0x118] sm:$0xff]
        %v377 = vld [vmem:[%s241 + $0x120] sm:$0xff]
        %v378 = vld [vmem:[%s241 + $0x128] sm:$0xff]
        %v379 = vld [vmem:[%s241 + $0x130] sm:$0xff]
        %v380 = vld [vmem:[%s241 + $0x138] sm:$0xff]
        %v381 = vld [vmem:[%s241 + $0x140] sm:$0xff]
        %v382 = vld [vmem:[%s241 + $0x148] sm:$0xff]
        %v383 = vld [vmem:[%s241 + $0x150] sm:$0xff]
        %v384 = vld [vmem:[%s241 + $0x158] sm:$0xff]
        %v385 = vld [vmem:[%s241 + $0x160] sm:$0xff]
        %v386 = vld [vmem:[%s241 + $0x168] sm:$0xff]
        %v387 = vld [vmem:[%s241 + $0x170] sm:$0xff]
        %v388 = vld [vmem:[%s241 + $0x178] sm:$0xff]
        %v389 = vld [vmem:[%s241 + $0x180] sm:$0xff]
        %v390 = vld [vmem:[%s241 + $0x188] sm:$0xff]
        %v391 = vld [vmem:[%s241 + $0x190] sm:$0xff]
        %v392 = vld [vmem:[%s241 + $0x198] sm:$0xff]
        %v393 = vld [vmem:[%s241 + $0x1a0] sm:$0xff]
        %v394 = vld [vmem:[%s241 + $0x1a8] sm:$0xff]
        %v395 = vld [vmem:[%s241 + $0x1b0] sm:$0xff]
        %v396 = vld [vmem:[%s241 + $0x1b8] sm:$0xff]
        %v397 = vld [vmem:[%s241 + $0x1c0] sm:$0xff]
        %v398 = vld [vmem:[%s241 + $0x1c8] sm:$0xff]
        %v399 = vld [vmem:[%s241 + $0x1d0] sm:$0xff]
        %v400 = vld [vmem:[%s241 + $0x1d8] sm:$0xff]
        %v401 = vld [vmem:[%s241 + $0x1e0] sm:$0xff]
        %v402 = vld [vmem:[%s241 + $0x1e8] sm:$0xff]
        %v403 = vld [vmem:[%s241 + $0x1f0] sm:$0xff]
        %v404 = vld [vmem:[%s241 + $0x1f8] sm:$0xff]
        %v405 = vld [vmem:[%s251] sm:$0xff]
        %v406 = vld [vmem:[%s251 + $0x8] sm:$0xff]
        %v407 = vld [vmem:[%s251 + $0x10] sm:$0xff]
        %v408 = vld [vmem:[%s251 + $0x18] sm:$0xff]
        %v409 = vld [vmem:[%s251 + $0x20] sm:$0xff]
        %v410 = vld [vmem:[%s251 + $0x28] sm:$0xff]
        %v411 = vld [vmem:[%s251 + $0x30] sm:$0xff]
        %v412 = vld [vmem:[%s251 + $0x38] sm:$0xff]
        %v413 = vld [vmem:[%s251 + $0x40] sm:$0xff]
        %v414 = vld [vmem:[%s251 + $0x48] sm:$0xff]
        %v415 = vld [vmem:[%s251 + $0x50] sm:$0xff]
        %v416 = vld [vmem:[%s251 + $0x58] sm:$0xff]
        %v417 = vld [vmem:[%s251 + $0x60] sm:$0xff]
        %v418 = vld [vmem:[%s251 + $0x68] sm:$0xff]
        %v419 = vld [vmem:[%s251 + $0x70] sm:$0xff]
        %v420 = vld [vmem:[%s251 + $0x78] sm:$0xff]
        %v421 = vld [vmem:[%s251 + $0x80] sm:$0xff]
        %v422 = vld [vmem:[%s251 + $0x88] sm:$0xff]
        %v423 = vld [vmem:[%s251 + $0x90] sm:$0xff]
        %v424 = vld [vmem:[%s251 + $0x98] sm:$0xff]
        %v425 = vld [vmem:[%s251 + $0xa0] sm:$0xff]
        %v426 = vld [vmem:[%s251 + $0xa8] sm:$0xff]
        %v427 = vld [vmem:[%s251 + $0xb0] sm:$0xff]
        %v428 = vld [vmem:[%s251 + $0xb8] sm:$0xff]
        %v429 = vld [vmem:[%s251 + $0xc0] sm:$0xff]
        %v430 = vld [vmem:[%s251 + $0xc8] sm:$0xff]
        %v431 = vld [vmem:[%s251 + $0xd0] sm:$0xff]
        %v432 = vld [vmem:[%s251 + $0xd8] sm:$0xff]
        %v433 = vld [vmem:[%s251 + $0xe0] sm:$0xff]
        %v434 = vld [vmem:[%s251 + $0xe8] sm:$0xff]
        %v435 = vld [vmem:[%s251 + $0xf0] sm:$0xff]
        %v436 = vld [vmem:[%s251 + $0xf8] sm:$0xff]
        %v437 = vld [vmem:[%s263] sm:$0xff]
        %v438 = vld [vmem:[%s263 + $0x8] sm:$0xff]
        %v439 = vld [vmem:[%s263 + $0x10] sm:$0xff]
        %v440 = vld [vmem:[%s263 + $0x18] sm:$0xff]
        %v441 = vld [vmem:[%s263 + $0x20] sm:$0xff]
        %v442 = vld [vmem:[%s263 + $0x28] sm:$0xff]
        %v443 = vld [vmem:[%s263 + $0x30] sm:$0xff]
        %v444 = vld [vmem:[%s263 + $0x38] sm:$0xff]
        %v445 = vld [vmem:[%s263 + $0x40] sm:$0xff]
        %v446 = vld [vmem:[%s263 + $0x48] sm:$0xff]
        %v447 = vld [vmem:[%s263 + $0x50] sm:$0xff]
        %v448 = vld [vmem:[%s263 + $0x58] sm:$0xff]
        %v449 = vld [vmem:[%s263 + $0x60] sm:$0xff]
        %v450 = vld [vmem:[%s263 + $0x68] sm:$0xff]
        %v451 = vld [vmem:[%s263 + $0x70] sm:$0xff]
        %v452 = vld [vmem:[%s263 + $0x78] sm:$0xff]
        %v453 = vld [vmem:[%s263 + $0x80] sm:$0xff]
        %v454 = vld [vmem:[%s263 + $0x88] sm:$0xff]
        %v455 = vld [vmem:[%s263 + $0x90] sm:$0xff]
        %v456 = vld [vmem:[%s263 + $0x98] sm:$0xff]
        %v457 = vld [vmem:[%s263 + $0xa0] sm:$0xff]
        %v458 = vld [vmem:[%s263 + $0xa8] sm:$0xff]
        %v459 = vld [vmem:[%s263 + $0xb0] sm:$0xff]
        %v460 = vld [vmem:[%s263 + $0xb8] sm:$0xff]
        %v461 = vld [vmem:[%s263 + $0xc0] sm:$0xff]
        %v462 = vld [vmem:[%s263 + $0xc8] sm:$0xff]
        %v463 = vld [vmem:[%s263 + $0xd0] sm:$0xff]
        %v464 = vld [vmem:[%s263 + $0xd8] sm:$0xff]
        %v465 = vld [vmem:[%s263 + $0xe0] sm:$0xff]
        %v466 = vld [vmem:[%s263 + $0xe8] sm:$0xff]
        %v467 = vld [vmem:[%s263 + $0xf0] sm:$0xff]
        %v468 = vld [vmem:[%s263 + $0xf8] sm:$0xff]
        %v469 = vld [vmem:[%s263 + $0x100] sm:$0xff]
        %v470 = vld [vmem:[%s263 + $0x108] sm:$0xff]
        %v471 = vld [vmem:[%s263 + $0x110] sm:$0xff]
        %v472 = vld [vmem:[%s263 + $0x118] sm:$0xff]
        %v473 = vld [vmem:[%s263 + $0x120] sm:$0xff]
        %v474 = vld [vmem:[%s263 + $0x128] sm:$0xff]
        %v475 = vld [vmem:[%s263 + $0x130] sm:$0xff]
        %v476 = vld [vmem:[%s263 + $0x138] sm:$0xff]
        %v477 = vld [vmem:[%s263 + $0x140] sm:$0xff]
        %v478 = vld [vmem:[%s263 + $0x148] sm:$0xff]
        %v479 = vld [vmem:[%s263 + $0x150] sm:$0xff]
        %v480 = vld [vmem:[%s263 + $0x158] sm:$0xff]
        %v481 = vld [vmem:[%s263 + $0x160] sm:$0xff]
        %v482 = vld [vmem:[%s263 + $0x168] sm:$0xff]
        %v483 = vld [vmem:[%s263 + $0x170] sm:$0xff]
        %v484 = vld [vmem:[%s263 + $0x178] sm:$0xff]
        %v485 = vld [vmem:[%s263 + $0x180] sm:$0xff]
        %v486 = vld [vmem:[%s263 + $0x188] sm:$0xff]
        %v487 = vld [vmem:[%s263 + $0x190] sm:$0xff]
        %v488 = vld [vmem:[%s263 + $0x198] sm:$0xff]
        %v489 = vld [vmem:[%s263 + $0x1a0] sm:$0xff]
        %v490 = vld [vmem:[%s263 + $0x1a8] sm:$0xff]
        %v491 = vld [vmem:[%s263 + $0x1b0] sm:$0xff]
        %v492 = vld [vmem:[%s263 + $0x1b8] sm:$0xff]
        %v493 = vld [vmem:[%s263 + $0x1c0] sm:$0xff]
        %v494 = vld [vmem:[%s263 + $0x1c8] sm:$0xff]
        %v495 = vld [vmem:[%s263 + $0x1d0] sm:$0xff]
        %v496 = vld [vmem:[%s263 + $0x1d8] sm:$0xff]
        %v497 = vld [vmem:[%s263 + $0x1e0] sm:$0xff]
        %v498 = vld [vmem:[%s263 + $0x1e8] sm:$0xff]
        %v499 = vld [vmem:[%s263 + $0x1f0] sm:$0xff]
        %v500 = vld [vmem:[%s263 + $0x1f8] sm:$0xff]
        %v501 = vld [vmem:[%s263 + $0x200] sm:$0xff]
        %v502 = vld [vmem:[%s263 + $0x208] sm:$0xff]
        %v503 = vld [vmem:[%s263 + $0x210] sm:$0xff]
        %v504 = vld [vmem:[%s263 + $0x218] sm:$0xff]
        %v505 = vld [vmem:[%s263 + $0x220] sm:$0xff]
        %v506 = vld [vmem:[%s263 + $0x228] sm:$0xff]
        %v507 = vld [vmem:[%s263 + $0x230] sm:$0xff]
        %v508 = vld [vmem:[%s263 + $0x238] sm:$0xff]
        %v509 = vld [vmem:[%s263 + $0x240] sm:$0xff]
        %v510 = vld [vmem:[%s263 + $0x248] sm:$0xff]
        %v511 = vld [vmem:[%s263 + $0x250] sm:$0xff]
        %v512 = vld [vmem:[%s263 + $0x258] sm:$0xff]
        %v513 = vld [vmem:[%s263 + $0x260] sm:$0xff]
        %v514 = vld [vmem:[%s263 + $0x268] sm:$0xff]
        %v515 = vld [vmem:[%s263 + $0x270] sm:$0xff]
        %v516 = vld [vmem:[%s263 + $0x278] sm:$0xff]
        %v517 = vld [vmem:[%s263 + $0x280] sm:$0xff]
        %v518 = vld [vmem:[%s263 + $0x288] sm:$0xff]
        %v519 = vld [vmem:[%s263 + $0x290] sm:$0xff]
        %v520 = vld [vmem:[%s263 + $0x298] sm:$0xff]
        %v521 = vld [vmem:[%s263 + $0x2a0] sm:$0xff]
        %v522 = vld [vmem:[%s263 + $0x2a8] sm:$0xff]
        %v523 = vld [vmem:[%s263 + $0x2b0] sm:$0xff]
        %v524 = vld [vmem:[%s263 + $0x2b8] sm:$0xff]
        %v525 = vld [vmem:[%s263 + $0x2c0] sm:$0xff]
        %v526 = vld [vmem:[%s263 + $0x2c8] sm:$0xff]
        %v527 = vld [vmem:[%s263 + $0x2d0] sm:$0xff]
        %v528 = vld [vmem:[%s263 + $0x2d8] sm:$0xff]
        %v529 = vld [vmem:[%s263 + $0x2e0] sm:$0xff]
        %v530 = vld [vmem:[%s263 + $0x2e8] sm:$0xff]
        %v531 = vld [vmem:[%s263 + $0x2f0] sm:$0xff]
        %v532 = vld [vmem:[%s263 + $0x2f8] sm:$0xff]
        %v533 = vld [vmem:[%s263 + $0x300] sm:$0xff]
        %v534 = vld [vmem:[%s263 + $0x308] sm:$0xff]
        %v535 = vld [vmem:[%s263 + $0x310] sm:$0xff]
        %v536 = vld [vmem:[%s263 + $0x318] sm:$0xff]
        %v537 = vld [vmem:[%s263 + $0x320] sm:$0xff]
        %v538 = vld [vmem:[%s263 + $0x328] sm:$0xff]
        %v539 = vld [vmem:[%s263 + $0x330] sm:$0xff]
        %v540 = vld [vmem:[%s263 + $0x338] sm:$0xff]
        %v541 = vld [vmem:[%s263 + $0x340] sm:$0xff]
        %v542 = vld [vmem:[%s263 + $0x348] sm:$0xff]
        %v543 = vld [vmem:[%s263 + $0x350] sm:$0xff]
        %v544 = vld [vmem:[%s263 + $0x358] sm:$0xff]
        %v545 = vld [vmem:[%s263 + $0x360] sm:$0xff]
        %v546 = vld [vmem:[%s263 + $0x368] sm:$0xff]
        %v547 = vld [vmem:[%s263 + $0x370] sm:$0xff]
        %v548 = vld [vmem:[%s263 + $0x378] sm:$0xff]
        %v549 = vld [vmem:[%s263 + $0x380] sm:$0xff]
        %v550 = vld [vmem:[%s263 + $0x388] sm:$0xff]
        %v551 = vld [vmem:[%s263 + $0x390] sm:$0xff]
        %v552 = vld [vmem:[%s263 + $0x398] sm:$0xff]
        %v553 = vld [vmem:[%s263 + $0x3a0] sm:$0xff]
        %v554 = vld [vmem:[%s263 + $0x3a8] sm:$0xff]
        %v555 = vld [vmem:[%s263 + $0x3b0] sm:$0xff]
        %v556 = vld [vmem:[%s263 + $0x3b8] sm:$0xff]
        %v557 = vld [vmem:[%s263 + $0x3c0] sm:$0xff]
        %v558 = vld [vmem:[%s263 + $0x3c8] sm:$0xff]
        %v559 = vld [vmem:[%s263 + $0x3d0] sm:$0xff]
        %v560 = vld [vmem:[%s263 + $0x3d8] sm:$0xff]
        %v561 = vld [vmem:[%s263 + $0x3e0] sm:$0xff]
        %v562 = vld [vmem:[%s263 + $0x3e8] sm:$0xff]
        %v563 = vld [vmem:[%s263 + $0x3f0] sm:$0xff]
        %v564 = vld [vmem:[%s263 + $0x3f8] sm:$0xff]
        %v597 = vunpack.c.l.b16 %v405
        %v598 = vunpack.c.h.b16 %v405
        %v599 = vunpack.c.l.b16 %v406
        %v600 = vunpack.c.h.b16 %v406
        %v601 = vunpack.c.l.b16 %v407
        %v602 = vunpack.c.h.b16 %v407
        %v603 = vunpack.c.l.b16 %v408
        %v604 = vunpack.c.h.b16 %v408
        %v605 = vunpack.c.l.b16 %v409
        %v606 = vunpack.c.h.b16 %v409
        %v607 = vunpack.c.l.b16 %v410
        %v608 = vunpack.c.h.b16 %v410
        %v609 = vunpack.c.l.b16 %v411
        %v610 = vunpack.c.h.b16 %v411
        %v611 = vunpack.c.l.b16 %v412
        %v612 = vunpack.c.h.b16 %v412
        %v613 = vunpack.c.l.b16 %v413
        %v614 = vunpack.c.h.b16 %v413
        %v615 = vunpack.c.l.b16 %v414
        %v616 = vunpack.c.h.b16 %v414
        %v617 = vunpack.c.l.b16 %v415
        %v618 = vunpack.c.h.b16 %v415
        %v619 = vunpack.c.l.b16 %v416
        %v620 = vunpack.c.h.b16 %v416
        %v621 = vunpack.c.l.b16 %v417
        %v622 = vunpack.c.h.b16 %v417
        %v623 = vunpack.c.l.b16 %v418
        %v624 = vunpack.c.h.b16 %v418
        %v625 = vunpack.c.l.b16 %v419
        %v626 = vunpack.c.h.b16 %v419
        %v627 = vunpack.c.l.b16 %v420
        %v628 = vunpack.c.h.b16 %v420
        %v629 = vunpack.c.l.b16 %v421
        %v630 = vunpack.c.h.b16 %v421
        %v631 = vunpack.c.l.b16 %v422
        %v632 = vunpack.c.h.b16 %v422
        %v633 = vunpack.c.l.b16 %v423
        %v634 = vunpack.c.h.b16 %v423
        %v635 = vunpack.c.l.b16 %v424
        %v636 = vunpack.c.h.b16 %v424
        %v637 = vunpack.c.l.b16 %v425
        %v638 = vunpack.c.h.b16 %v425
        %v639 = vunpack.c.l.b16 %v426
        %v640 = vunpack.c.h.b16 %v426
        %v641 = vunpack.c.l.b16 %v427
        %v642 = vunpack.c.h.b16 %v427
        %v643 = vunpack.c.l.b16 %v428
        %v644 = vunpack.c.h.b16 %v428
        %v645 = vunpack.c.l.b16 %v429
        %v646 = vunpack.c.h.b16 %v429
        %v647 = vunpack.c.l.b16 %v430
        %v648 = vunpack.c.h.b16 %v430
        %v649 = vunpack.c.l.b16 %v431
        %v650 = vunpack.c.h.b16 %v431
        %v651 = vunpack.c.l.b16 %v432
        %v652 = vunpack.c.h.b16 %v432
        %v653 = vunpack.c.l.b16 %v433
        %v654 = vunpack.c.h.b16 %v433
        %v655 = vunpack.c.l.b16 %v434
        %v656 = vunpack.c.h.b16 %v434
        %v657 = vunpack.c.l.b16 %v435
        %v658 = vunpack.c.h.b16 %v435
        %v659 = vunpack.c.l.b16 %v436
        %v660 = vunpack.c.h.b16 %v436
        %v661 = vpack.c.b16 %v601, %v597
        %v662 = vpack.c.b16 %v602, %v598
        %v663 = vpack.c.b16 %v603, %v599
        %v664 = vpack.c.b16 %v604, %v600
        %v665 = vpack.c.b16 %v609, %v605
        %v666 = vpack.c.b16 %v610, %v606
        %v667 = vpack.c.b16 %v611, %v607
        %v668 = vpack.c.b16 %v612, %v608
        %v669 = vpack.c.b16 %v617, %v613
        %v670 = vpack.c.b16 %v618, %v614
        %v671 = vpack.c.b16 %v619, %v615
        %v672 = vpack.c.b16 %v620, %v616
        %v673 = vpack.c.b16 %v625, %v621
        %v674 = vpack.c.b16 %v626, %v622
        %v675 = vpack.c.b16 %v627, %v623
        %v676 = vpack.c.b16 %v628, %v624
        %v677 = vpack.c.b16 %v633, %v629
        %v678 = vpack.c.b16 %v634, %v630
        %v679 = vpack.c.b16 %v635, %v631
        %v680 = vpack.c.b16 %v636, %v632
        %v681 = vpack.c.b16 %v641, %v637
        %v682 = vpack.c.b16 %v642, %v638
        %v683 = vpack.c.b16 %v643, %v639
        %v684 = vpack.c.b16 %v644, %v640
        %v685 = vpack.c.b16 %v649, %v645
        %v686 = vpack.c.b16 %v650, %v646
        %v687 = vpack.c.b16 %v651, %v647
        %v688 = vpack.c.b16 %v652, %v648
        %v689 = vpack.c.b16 %v657, %v653
        %v690 = vpack.c.b16 %v658, %v654
        %v691 = vpack.c.b16 %v659, %v655
        %v692 = vpack.c.b16 %v660, %v656
        %v853 = vunpack.c.l.b16 %v437
        %v854 = vunpack.c.h.b16 %v437
        %v855 = vunpack.c.l.b16 %v438
        %v856 = vunpack.c.h.b16 %v438
        %v857 = vunpack.c.l.b16 %v439
        %v858 = vunpack.c.h.b16 %v439
        %v859 = vunpack.c.l.b16 %v440
        %v860 = vunpack.c.h.b16 %v440
        %v861 = vunpack.c.l.b16 %v441
        %v862 = vunpack.c.h.b16 %v441
        %v863 = vunpack.c.l.b16 %v442
        %v864 = vunpack.c.h.b16 %v442
        %v865 = vunpack.c.l.b16 %v443
        %v866 = vunpack.c.h.b16 %v443
        %v867 = vunpack.c.l.b16 %v444
        %v868 = vunpack.c.h.b16 %v444
        %v869 = vunpack.c.l.b16 %v445
        %v870 = vunpack.c.h.b16 %v445
        %v871 = vunpack.c.l.b16 %v446
        %v872 = vunpack.c.h.b16 %v446
        %v873 = vunpack.c.l.b16 %v447
        %v874 = vunpack.c.h.b16 %v447
        %v875 = vunpack.c.l.b16 %v448
        %v876 = vunpack.c.h.b16 %v448
        %v877 = vunpack.c.l.b16 %v449
        %v878 = vunpack.c.h.b16 %v449
        %v879 = vunpack.c.l.b16 %v450
        %v880 = vunpack.c.h.b16 %v450
        %v881 = vunpack.c.l.b16 %v451
        %v882 = vunpack.c.h.b16 %v451
        %v883 = vunpack.c.l.b16 %v452
        %v884 = vunpack.c.h.b16 %v452
        %v885 = vunpack.c.l.b16 %v453
        %v886 = vunpack.c.h.b16 %v453
        %v887 = vunpack.c.l.b16 %v454
        %v888 = vunpack.c.h.b16 %v454
        %v889 = vunpack.c.l.b16 %v455
        %v890 = vunpack.c.h.b16 %v455
        %v891 = vunpack.c.l.b16 %v456
        %v892 = vunpack.c.h.b16 %v456
        %v893 = vunpack.c.l.b16 %v457
        %v894 = vunpack.c.h.b16 %v457
        %v895 = vunpack.c.l.b16 %v458
        %v896 = vunpack.c.h.b16 %v458
        %v897 = vunpack.c.l.b16 %v459
        %v898 = vunpack.c.h.b16 %v459
        %v899 = vunpack.c.l.b16 %v460
        %v900 = vunpack.c.h.b16 %v460
        %v901 = vunpack.c.l.b16 %v461
        %v902 = vunpack.c.h.b16 %v461
        %v903 = vunpack.c.l.b16 %v462
        %v904 = vunpack.c.h.b16 %v462
        %v905 = vunpack.c.l.b16 %v463
        %v906 = vunpack.c.h.b16 %v463
        %v907 = vunpack.c.l.b16 %v464
        %v908 = vunpack.c.h.b16 %v464
        %v909 = vunpack.c.l.b16 %v465
        %v910 = vunpack.c.h.b16 %v465
        %v911 = vunpack.c.l.b16 %v466
        %v912 = vunpack.c.h.b16 %v466
        %v913 = vunpack.c.l.b16 %v467
        %v914 = vunpack.c.h.b16 %v467
        %v915 = vunpack.c.l.b16 %v468
        %v916 = vunpack.c.h.b16 %v468
        %v917 = vunpack.c.l.b16 %v469
        %v918 = vunpack.c.h.b16 %v469
        %v919 = vunpack.c.l.b16 %v470
        %v920 = vunpack.c.h.b16 %v470
        %v921 = vunpack.c.l.b16 %v471
        %v922 = vunpack.c.h.b16 %v471
        %v923 = vunpack.c.l.b16 %v472
        %v924 = vunpack.c.h.b16 %v472
        %v925 = vunpack.c.l.b16 %v473
        %v926 = vunpack.c.h.b16 %v473
        %v927 = vunpack.c.l.b16 %v474
        %v928 = vunpack.c.h.b16 %v474
        %v929 = vunpack.c.l.b16 %v475
        %v930 = vunpack.c.h.b16 %v475
        %v931 = vunpack.c.l.b16 %v476
        %v932 = vunpack.c.h.b16 %v476
        %v933 = vunpack.c.l.b16 %v477
        %v934 = vunpack.c.h.b16 %v477
        %v935 = vunpack.c.l.b16 %v478
        %v936 = vunpack.c.h.b16 %v478
        %v937 = vunpack.c.l.b16 %v479
        %v938 = vunpack.c.h.b16 %v479
        %v939 = vunpack.c.l.b16 %v480
        %v940 = vunpack.c.h.b16 %v480
        %v941 = vunpack.c.l.b16 %v481
        %v942 = vunpack.c.h.b16 %v481
        %v943 = vunpack.c.l.b16 %v482
        %v944 = vunpack.c.h.b16 %v482
        %v945 = vunpack.c.l.b16 %v483
        %v946 = vunpack.c.h.b16 %v483
        %v947 = vunpack.c.l.b16 %v484
        %v948 = vunpack.c.h.b16 %v484
        %v949 = vunpack.c.l.b16 %v485
        %v950 = vunpack.c.h.b16 %v485
        %v951 = vunpack.c.l.b16 %v486
        %v952 = vunpack.c.h.b16 %v486
        %v953 = vunpack.c.l.b16 %v487
        %v954 = vunpack.c.h.b16 %v487
        %v955 = vunpack.c.l.b16 %v488
        %v956 = vunpack.c.h.b16 %v488
        %v957 = vunpack.c.l.b16 %v489
        %v958 = vunpack.c.h.b16 %v489
        %v959 = vunpack.c.l.b16 %v490
        %v960 = vunpack.c.h.b16 %v490
        %v961 = vunpack.c.l.b16 %v491
        %v962 = vunpack.c.h.b16 %v491
        %v963 = vunpack.c.l.b16 %v492
        %v964 = vunpack.c.h.b16 %v492
        %v965 = vunpack.c.l.b16 %v493
        %v966 = vunpack.c.h.b16 %v493
        %v967 = vunpack.c.l.b16 %v494
        %v968 = vunpack.c.h.b16 %v494
        %v969 = vunpack.c.l.b16 %v495
        %v970 = vunpack.c.h.b16 %v495
        %v971 = vunpack.c.l.b16 %v496
        %v972 = vunpack.c.h.b16 %v496
        %v973 = vunpack.c.l.b16 %v497
        %v974 = vunpack.c.h.b16 %v497
        %v975 = vunpack.c.l.b16 %v498
        %v976 = vunpack.c.h.b16 %v498
        %v977 = vunpack.c.l.b16 %v499
        %v978 = vunpack.c.h.b16 %v499
        %v979 = vunpack.c.l.b16 %v500
        %v980 = vunpack.c.h.b16 %v500
        %v981 = vunpack.c.l.b16 %v501
        %v982 = vunpack.c.h.b16 %v501
        %v983 = vunpack.c.l.b16 %v502
        %v984 = vunpack.c.h.b16 %v502
        %v985 = vunpack.c.l.b16 %v503
        %v986 = vunpack.c.h.b16 %v503
        %v987 = vunpack.c.l.b16 %v504
        %v988 = vunpack.c.h.b16 %v504
        %v989 = vunpack.c.l.b16 %v505
        %v990 = vunpack.c.h.b16 %v505
        %v991 = vunpack.c.l.b16 %v506
        %v992 = vunpack.c.h.b16 %v506
        %v993 = vunpack.c.l.b16 %v507
        %v994 = vunpack.c.h.b16 %v507
        %v995 = vunpack.c.l.b16 %v508
        %v996 = vunpack.c.h.b16 %v508
        %v997 = vunpack.c.l.b16 %v509
        %v998 = vunpack.c.h.b16 %v509
        %v999 = vunpack.c.l.b16 %v510
        %v1000 = vunpack.c.h.b16 %v510
        %v1001 = vunpack.c.l.b16 %v511
        %v1002 = vunpack.c.h.b16 %v511
        %v1003 = vunpack.c.l.b16 %v512
        %v1004 = vunpack.c.h.b16 %v512
        %v1005 = vunpack.c.l.b16 %v513
        %v1006 = vunpack.c.h.b16 %v513
        %v1007 = vunpack.c.l.b16 %v514
        %v1008 = vunpack.c.h.b16 %v514
        %v1009 = vunpack.c.l.b16 %v515
        %v1010 = vunpack.c.h.b16 %v515
        %v1011 = vunpack.c.l.b16 %v516
        %v1012 = vunpack.c.h.b16 %v516
        %v1013 = vunpack.c.l.b16 %v517
        %v1014 = vunpack.c.h.b16 %v517
        %v1015 = vunpack.c.l.b16 %v518
        %v1016 = vunpack.c.h.b16 %v518
        %v1017 = vunpack.c.l.b16 %v519
        %v1018 = vunpack.c.h.b16 %v519
        %v1019 = vunpack.c.l.b16 %v520
        %v1020 = vunpack.c.h.b16 %v520
        %v1021 = vunpack.c.l.b16 %v521
        %v1022 = vunpack.c.h.b16 %v521
        %v1023 = vunpack.c.l.b16 %v522
        %v1024 = vunpack.c.h.b16 %v522
        %v1025 = vunpack.c.l.b16 %v523
        %v1026 = vunpack.c.h.b16 %v523
        %v1027 = vunpack.c.l.b16 %v524
        %v1028 = vunpack.c.h.b16 %v524
        %v1029 = vunpack.c.l.b16 %v525
        %v1030 = vunpack.c.h.b16 %v525
        %v1031 = vunpack.c.l.b16 %v526
        %v1032 = vunpack.c.h.b16 %v526
        %v1033 = vunpack.c.l.b16 %v527
        %v1034 = vunpack.c.h.b16 %v527
        %v1035 = vunpack.c.l.b16 %v528
        %v1036 = vunpack.c.h.b16 %v528
        %v1037 = vunpack.c.l.b16 %v529
        %v1038 = vunpack.c.h.b16 %v529
        %v1039 = vunpack.c.l.b16 %v530
        %v1040 = vunpack.c.h.b16 %v530
        %v1041 = vunpack.c.l.b16 %v531
        %v1042 = vunpack.c.h.b16 %v531
        %v1043 = vunpack.c.l.b16 %v532
        %v1044 = vunpack.c.h.b16 %v532
        %v1045 = vunpack.c.l.b16 %v533
        %v1046 = vunpack.c.h.b16 %v533
        %v1047 = vunpack.c.l.b16 %v534
        %v1048 = vunpack.c.h.b16 %v534
        %v1049 = vunpack.c.l.b16 %v535
        %v1050 = vunpack.c.h.b16 %v535
        %v1051 = vunpack.c.l.b16 %v536
        %v1052 = vunpack.c.h.b16 %v536
        %v1053 = vunpack.c.l.b16 %v537
        %v1054 = vunpack.c.h.b16 %v537
        %v1055 = vunpack.c.l.b16 %v538
        %v1056 = vunpack.c.h.b16 %v538
        %v1057 = vunpack.c.l.b16 %v539
        %v1058 = vunpack.c.h.b16 %v539
        %v1059 = vunpack.c.l.b16 %v540
        %v1060 = vunpack.c.h.b16 %v540
        %v1061 = vunpack.c.l.b16 %v541
        %v1062 = vunpack.c.h.b16 %v541
        %v1063 = vunpack.c.l.b16 %v542
        %v1064 = vunpack.c.h.b16 %v542
        %v1065 = vunpack.c.l.b16 %v543
        %v1066 = vunpack.c.h.b16 %v543
        %v1067 = vunpack.c.l.b16 %v544
        %v1068 = vunpack.c.h.b16 %v544
        %v1069 = vunpack.c.l.b16 %v545
        %v1070 = vunpack.c.h.b16 %v545
        %v1071 = vunpack.c.l.b16 %v546
        %v1072 = vunpack.c.h.b16 %v546
        %v1073 = vunpack.c.l.b16 %v547
        %v1074 = vunpack.c.h.b16 %v547
        %v1075 = vunpack.c.l.b16 %v548
        %v1076 = vunpack.c.h.b16 %v548
        %v1077 = vunpack.c.l.b16 %v549
        %v1078 = vunpack.c.h.b16 %v549
        %v1079 = vunpack.c.l.b16 %v550
        %v1080 = vunpack.c.h.b16 %v550
        %v1081 = vunpack.c.l.b16 %v551
        %v1082 = vunpack.c.h.b16 %v551
        %v1083 = vunpack.c.l.b16 %v552
        %v1084 = vunpack.c.h.b16 %v552
        %v1085 = vunpack.c.l.b16 %v553
        %v1086 = vunpack.c.h.b16 %v553
        %v1087 = vunpack.c.l.b16 %v554
        %v1088 = vunpack.c.h.b16 %v554
        %v1089 = vunpack.c.l.b16 %v555
        %v1090 = vunpack.c.h.b16 %v555
        %v1091 = vunpack.c.l.b16 %v556
        %v1092 = vunpack.c.h.b16 %v556
        %v1093 = vunpack.c.l.b16 %v557
        %v1094 = vunpack.c.h.b16 %v557
        %v1095 = vunpack.c.l.b16 %v558
        %v1096 = vunpack.c.h.b16 %v558
        %v1097 = vunpack.c.l.b16 %v559
        %v1098 = vunpack.c.h.b16 %v559
        %v1099 = vunpack.c.l.b16 %v560
        %v1100 = vunpack.c.h.b16 %v560
        %v1101 = vunpack.c.l.b16 %v561
        %v1102 = vunpack.c.h.b16 %v561
        %v1103 = vunpack.c.l.b16 %v562
        %v1104 = vunpack.c.h.b16 %v562
        %v1105 = vunpack.c.l.b16 %v563
        %v1106 = vunpack.c.h.b16 %v563
        %v1107 = vunpack.c.l.b16 %v564
        %v1108 = vunpack.c.h.b16 %v564
        %v1109 = vpack.c.b16 %v857, %v853
        %v1110 = vpack.c.b16 %v858, %v854
        %v1111 = vpack.c.b16 %v859, %v855
        %v1112 = vpack.c.b16 %v860, %v856
        %v1113 = vpack.c.b16 %v865, %v861
        %v1114 = vpack.c.b16 %v866, %v862
        %v1115 = vpack.c.b16 %v867, %v863
        %v1116 = vpack.c.b16 %v868, %v864
        %v1117 = vpack.c.b16 %v873, %v869
        %v1118 = vpack.c.b16 %v874, %v870
        %v1119 = vpack.c.b16 %v875, %v871
        %v1120 = vpack.c.b16 %v876, %v872
        %v1121 = vpack.c.b16 %v881, %v877
        %v1122 = vpack.c.b16 %v882, %v878
        %v1123 = vpack.c.b16 %v883, %v879
        %v1124 = vpack.c.b16 %v884, %v880
        %v1125 = vpack.c.b16 %v889, %v885
        %v1126 = vpack.c.b16 %v890, %v886
        %v1127 = vpack.c.b16 %v891, %v887
        %v1128 = vpack.c.b16 %v892, %v888
        %v1129 = vpack.c.b16 %v897, %v893
        %v1130 = vpack.c.b16 %v898, %v894
        %v1131 = vpack.c.b16 %v899, %v895
        %v1132 = vpack.c.b16 %v900, %v896
        %v1133 = vpack.c.b16 %v905, %v901
        %v1134 = vpack.c.b16 %v906, %v902
        %v1135 = vpack.c.b16 %v907, %v903
        %v1136 = vpack.c.b16 %v908, %v904
        %v1137 = vpack.c.b16 %v913, %v909
        %v1138 = vpack.c.b16 %v914, %v910
        %v1139 = vpack.c.b16 %v915, %v911
        %v1140 = vpack.c.b16 %v916, %v912
        %v1141 = vpack.c.b16 %v921, %v917
        %v1142 = vpack.c.b16 %v922, %v918
        %v1143 = vpack.c.b16 %v923, %v919
        %v1144 = vpack.c.b16 %v924, %v920
        %v1145 = vpack.c.b16 %v929, %v925
        %v1146 = vpack.c.b16 %v930, %v926
        %v1147 = vpack.c.b16 %v931, %v927
        %v1148 = vpack.c.b16 %v932, %v928
        %v1149 = vpack.c.b16 %v937, %v933
        %v1150 = vpack.c.b16 %v938, %v934
        %v1151 = vpack.c.b16 %v939, %v935
        %v1152 = vpack.c.b16 %v940, %v936
        %v1153 = vpack.c.b16 %v945, %v941
        %v1154 = vpack.c.b16 %v946, %v942
        %v1155 = vpack.c.b16 %v947, %v943
        %v1156 = vpack.c.b16 %v948, %v944
        %v1157 = vpack.c.b16 %v953, %v949
        %v1158 = vpack.c.b16 %v954, %v950
        %v1159 = vpack.c.b16 %v955, %v951
        %v1160 = vpack.c.b16 %v956, %v952
        %v1161 = vpack.c.b16 %v961, %v957
        %v1162 = vpack.c.b16 %v962, %v958
        %v1163 = vpack.c.b16 %v963, %v959
        %v1164 = vpack.c.b16 %v964, %v960
        %v1165 = vpack.c.b16 %v969, %v965
        %v1166 = vpack.c.b16 %v970, %v966
        %v1167 = vpack.c.b16 %v971, %v967
        %v1168 = vpack.c.b16 %v972, %v968
        %v1169 = vpack.c.b16 %v977, %v973
        %v1170 = vpack.c.b16 %v978, %v974
        %v1171 = vpack.c.b16 %v979, %v975
        %v1172 = vpack.c.b16 %v980, %v976
        %v1173 = vpack.c.b16 %v985, %v981
        %v1174 = vpack.c.b16 %v986, %v982
        %v1175 = vpack.c.b16 %v987, %v983
        %v1176 = vpack.c.b16 %v988, %v984
        %v1177 = vpack.c.b16 %v993, %v989
        %v1178 = vpack.c.b16 %v994, %v990
        %v1179 = vpack.c.b16 %v995, %v991
        %v1180 = vpack.c.b16 %v996, %v992
        %v1181 = vpack.c.b16 %v1001, %v997
        %v1182 = vpack.c.b16 %v1002, %v998
        %v1183 = vpack.c.b16 %v1003, %v999
        %v1184 = vpack.c.b16 %v1004, %v1000
        %v1185 = vpack.c.b16 %v1009, %v1005
        %v1186 = vpack.c.b16 %v1010, %v1006
        %v1187 = vpack.c.b16 %v1011, %v1007
        %v1188 = vpack.c.b16 %v1012, %v1008
        %v1189 = vpack.c.b16 %v1017, %v1013
        %v1190 = vpack.c.b16 %v1018, %v1014
        %v1191 = vpack.c.b16 %v1019, %v1015
        %v1192 = vpack.c.b16 %v1020, %v1016
        %v1193 = vpack.c.b16 %v1025, %v1021
        %v1194 = vpack.c.b16 %v1026, %v1022
        %v1195 = vpack.c.b16 %v1027, %v1023
        %v1196 = vpack.c.b16 %v1028, %v1024
        %v1197 = vpack.c.b16 %v1033, %v1029
        %v1198 = vpack.c.b16 %v1034, %v1030
        %v1199 = vpack.c.b16 %v1035, %v1031
        %v1200 = vpack.c.b16 %v1036, %v1032
        %v1201 = vpack.c.b16 %v1041, %v1037
        %v1202 = vpack.c.b16 %v1042, %v1038
        %v1203 = vpack.c.b16 %v1043, %v1039
        %v1204 = vpack.c.b16 %v1044, %v1040
        %v1205 = vpack.c.b16 %v1049, %v1045
        %v1206 = vpack.c.b16 %v1050, %v1046
        %v1207 = vpack.c.b16 %v1051, %v1047
        %v1208 = vpack.c.b16 %v1052, %v1048
        %v1209 = vpack.c.b16 %v1057, %v1053
        %v1210 = vpack.c.b16 %v1058, %v1054
        %v1211 = vpack.c.b16 %v1059, %v1055
        %v1212 = vpack.c.b16 %v1060, %v1056
        %v1213 = vpack.c.b16 %v1065, %v1061
        %v1214 = vpack.c.b16 %v1066, %v1062
        %v1215 = vpack.c.b16 %v1067, %v1063
        %v1216 = vpack.c.b16 %v1068, %v1064
        %v1217 = vpack.c.b16 %v1073, %v1069
        %v1218 = vpack.c.b16 %v1074, %v1070
        %v1219 = vpack.c.b16 %v1075, %v1071
        %v1220 = vpack.c.b16 %v1076, %v1072
        %v1221 = vpack.c.b16 %v1081, %v1077
        %v1222 = vpack.c.b16 %v1082, %v1078
        %v1223 = vpack.c.b16 %v1083, %v1079
        %v1224 = vpack.c.b16 %v1084, %v1080
        %v1225 = vpack.c.b16 %v1089, %v1085
        %v1226 = vpack.c.b16 %v1090, %v1086
        %v1227 = vpack.c.b16 %v1091, %v1087
        %v1228 = vpack.c.b16 %v1092, %v1088
        %v1229 = vpack.c.b16 %v1097, %v1093
        %v1230 = vpack.c.b16 %v1098, %v1094
        %v1231 = vpack.c.b16 %v1099, %v1095
        %v1232 = vpack.c.b16 %v1100, %v1096
        %v1233 = vpack.c.b16 %v1105, %v1101
        %v1234 = vpack.c.b16 %v1106, %v1102
        %v1235 = vpack.c.b16 %v1107, %v1103
        %v1236 = vpack.c.b16 %v1108, %v1104
        %1365 = vmatpush.bf16.msra.mxu0 %v1137
        %1366 = vmatpush.bf16.msra.mxu0 %v1133
        %1367 = vmatpush.bf16.msra.mxu0 %v1129
        %1368 = vmatpush.bf16.msra.mxu0 %v1125
        %1369 = vmatpush.bf16.msra.mxu0 %v1121
        %1370 = vmatpush.bf16.msra.mxu0 %v1117
        %1371 = vmatpush.bf16.msra.mxu0 %v1113
        %1372 = vmatpush.bf16.msra.mxu0 %v1109
        %1373 = vmatmul.bf16.gmra.mxu0 %v661
        %v1374 = vpop.f32.mrf.mxu0
        %v1375 = vadd.f32 0.0, %v1374
        %v1376 = vpop.f32.mrf.mxu0
        %v1377 = vadd.f32 0.0, %v1376
        %1378 = vmatmul.bf16.gmra.mxu0 %v665
        %v1379 = vpop.f32.mrf.mxu0
        %v1380 = vadd.f32 0.0, %v1379
        %v1381 = vpop.f32.mrf.mxu0
        %v1382 = vadd.f32 0.0, %v1381
        %1383 = vmatmul.bf16.gmra.mxu0 %v669
        %v1384 = vpop.f32.mrf.mxu0
        %v1385 = vadd.f32 0.0, %v1384
        %v1386 = vpop.f32.mrf.mxu0
        %v1387 = vadd.f32 0.0, %v1386
        %1388 = vmatmul.bf16.gmra.mxu0 %v673
        %v1389 = vpop.f32.mrf.mxu0
        %v1390 = vadd.f32 0.0, %v1389
        %v1391 = vpop.f32.mrf.mxu0
        %v1392 = vadd.f32 0.0, %v1391
        %1393 = vmatmul.bf16.gmra.mxu0 %v677
        %v1394 = vpop.f32.mrf.mxu0
        %v1395 = vadd.f32 0.0, %v1394
        %v1396 = vpop.f32.mrf.mxu0
        %v1397 = vadd.f32 0.0, %v1396
        %1398 = vmatmul.bf16.gmra.mxu0 %v681
        %v1399 = vpop.f32.mrf.mxu0
        %v1400 = vadd.f32 0.0, %v1399
        %v1401 = vpop.f32.mrf.mxu0
        %v1402 = vadd.f32 0.0, %v1401
        %1403 = vmatmul.bf16.gmra.mxu0 %v685
        %v1404 = vpop.f32.mrf.mxu0
        %v1405 = vadd.f32 0.0, %v1404
        %v1406 = vpop.f32.mrf.mxu0
        %v1407 = vadd.f32 0.0, %v1406
        %1408 = vmatmul.bf16.gmra.mxu0 %v689
        %v1409 = vpop.f32.mrf.mxu0
        %v1410 = vadd.f32 0.0, %v1409
        %v1411 = vpop.f32.mrf.mxu0
        %v1412 = vadd.f32 0.0, %v1411
        %1413 = vdwg.mxu0
        %1414 = vmatpush.bf16.msra.mxu0 %v1169
        %1415 = vmatpush.bf16.msra.mxu0 %v1165
        %1416 = vmatpush.bf16.msra.mxu0 %v1161
        %1417 = vmatpush.bf16.msra.mxu0 %v1157
        %1418 = vmatpush.bf16.msra.mxu0 %v1153
        %1419 = vmatpush.bf16.msra.mxu0 %v1149
        %1420 = vmatpush.bf16.msra.mxu0 %v1145
        %1421 = vmatpush.bf16.msra.mxu0 %v1141
        %1422 = vmatmul.bf16.gmra.mxu0 %v662
        %v1423 = vpop.f32.mrf.mxu0
        %v1424 = vadd.f32 %v1375, %v1423
        %v1425 = vpop.f32.mrf.mxu0
        %v1426 = vadd.f32 %v1377, %v1425
        %1427 = vmatmul.bf16.gmra.mxu0 %v666
        %v1428 = vpop.f32.mrf.mxu0
        %v1429 = vadd.f32 %v1380, %v1428
        %v1430 = vpop.f32.mrf.mxu0
        %v1431 = vadd.f32 %v1382, %v1430
        %1432 = vmatmul.bf16.gmra.mxu0 %v670
        %v1433 = vpop.f32.mrf.mxu0
        %v1434 = vadd.f32 %v1385, %v1433
        %v1435 = vpop.f32.mrf.mxu0
        %v1436 = vadd.f32 %v1387, %v1435
        %1437 = vmatmul.bf16.gmra.mxu0 %v674
        %v1438 = vpop.f32.mrf.mxu0
        %v1439 = vadd.f32 %v1390, %v1438
        %v1440 = vpop.f32.mrf.mxu0
        %v1441 = vadd.f32 %v1392, %v1440
        %1442 = vmatmul.bf16.gmra.mxu0 %v678
        %v1443 = vpop.f32.mrf.mxu0
        %v1444 = vadd.f32 %v1395, %v1443
        %v1445 = vpop.f32.mrf.mxu0
        %v1446 = vadd.f32 %v1397, %v1445
        %1447 = vmatmul.bf16.gmra.mxu0 %v682
        %v1448 = vpop.f32.mrf.mxu0
        %v1449 = vadd.f32 %v1400, %v1448
        %v1450 = vpop.f32.mrf.mxu0
        %v1451 = vadd.f32 %v1402, %v1450
        %1452 = vmatmul.bf16.gmra.mxu0 %v686
        %v1453 = vpop.f32.mrf.mxu0
        %v1454 = vadd.f32 %v1405, %v1453
        %v1455 = vpop.f32.mrf.mxu0
        %v1456 = vadd.f32 %v1407, %v1455
        %1457 = vmatmul.bf16.gmra.mxu0 %v690
        %v1458 = vpop.f32.mrf.mxu0
        %v1459 = vadd.f32 %v1410, %v1458
        %v1460 = vpop.f32.mrf.mxu0
        %v1461 = vadd.f32 %v1412, %v1460
        %1462 = vdwg.mxu0
        %1463 = vmatpush.bf16.msra.mxu0 %v1201
        %1464 = vmatpush.bf16.msra.mxu0 %v1197
        %1465 = vmatpush.bf16.msra.mxu0 %v1193
        %1466 = vmatpush.bf16.msra.mxu0 %v1189
        %1467 = vmatpush.bf16.msra.mxu0 %v1185
        %1468 = vmatpush.bf16.msra.mxu0 %v1181
        %1469 = vmatpush.bf16.msra.mxu0 %v1177
        %1470 = vmatpush.bf16.msra.mxu0 %v1173
        %1471 = vmatmul.bf16.gmra.mxu0 %v663
        %v1472 = vpop.f32.mrf.mxu0
        %v1473 = vadd.f32 %v1424, %v1472
        %v1474 = vpop.f32.mrf.mxu0
        %v1475 = vadd.f32 %v1426, %v1474
        %1476 = vmatmul.bf16.gmra.mxu0 %v667
        %v1477 = vpop.f32.mrf.mxu0
        %v1478 = vadd.f32 %v1429, %v1477
        %v1479 = vpop.f32.mrf.mxu0
        %v1480 = vadd.f32 %v1431, %v1479
        %1481 = vmatmul.bf16.gmra.mxu0 %v671
        %v1482 = vpop.f32.mrf.mxu0
        %v1483 = vadd.f32 %v1434, %v1482
        %v1484 = vpop.f32.mrf.mxu0
        %v1485 = vadd.f32 %v1436, %v1484
        %1486 = vmatmul.bf16.gmra.mxu0 %v675
        %v1487 = vpop.f32.mrf.mxu0
        %v1488 = vadd.f32 %v1439, %v1487
        %v1489 = vpop.f32.mrf.mxu0
        %v1490 = vadd.f32 %v1441, %v1489
        %1491 = vmatmul.bf16.gmra.mxu0 %v679
        %v1492 = vpop.f32.mrf.mxu0
        %v1493 = vadd.f32 %v1444, %v1492
        %v1494 = vpop.f32.mrf.mxu0
        %v1495 = vadd.f32 %v1446, %v1494
        %1496 = vmatmul.bf16.gmra.mxu0 %v683
        %v1497 = vpop.f32.mrf.mxu0
        %v1498 = vadd.f32 %v1449, %v1497
        %v1499 = vpop.f32.mrf.mxu0
        %v1500 = vadd.f32 %v1451, %v1499
        %1501 = vmatmul.bf16.gmra.mxu0 %v687
        %v1502 = vpop.f32.mrf.mxu0
        %v1503 = vadd.f32 %v1454, %v1502
        %v1504 = vpop.f32.mrf.mxu0
        %v1505 = vadd.f32 %v1456, %v1504
        %1506 = vmatmul.bf16.gmra.mxu0 %v691
        %v1507 = vpop.f32.mrf.mxu0
        %v1508 = vadd.f32 %v1459, %v1507
        %v1509 = vpop.f32.mrf.mxu0
        %v1510 = vadd.f32 %v1461, %v1509
        %1511 = vdwg.mxu0
        %1512 = vmatpush.bf16.msra.mxu0 %v1233
        %1513 = vmatpush.bf16.msra.mxu0 %v1229
        %1514 = vmatpush.bf16.msra.mxu0 %v1225
        %1515 = vmatpush.bf16.msra.mxu0 %v1221
        %1516 = vmatpush.bf16.msra.mxu0 %v1217
        %1517 = vmatpush.bf16.msra.mxu0 %v1213
        %1518 = vmatpush.bf16.msra.mxu0 %v1209
        %1519 = vmatpush.bf16.msra.mxu0 %v1205
        %1520 = vmatmul.bf16.gmra.mxu0 %v664
        %v1521 = vpop.f32.mrf.mxu0
        %v1522 = vadd.f32 %v1473, %v1521
        %v1523 = vpop.f32.mrf.mxu0
        %v1524 = vadd.f32 %v1475, %v1523
        %1525 = vmatmul.bf16.gmra.mxu0 %v668
        %v1526 = vpop.f32.mrf.mxu0
        %v1527 = vadd.f32 %v1478, %v1526
        %v1528 = vpop.f32.mrf.mxu0
        %v1529 = vadd.f32 %v1480, %v1528
        %1530 = vmatmul.bf16.gmra.mxu0 %v672
        %v1531 = vpop.f32.mrf.mxu0
        %v1532 = vadd.f32 %v1483, %v1531
        %v1533 = vpop.f32.mrf.mxu0
        %v1534 = vadd.f32 %v1485, %v1533
        %1535 = vmatmul.bf16.gmra.mxu0 %v676
        %v1536 = vpop.f32.mrf.mxu0
        %v1537 = vadd.f32 %v1488, %v1536
        %v1538 = vpop.f32.mrf.mxu0
        %v1539 = vadd.f32 %v1490, %v1538
        %1540 = vmatmul.bf16.gmra.mxu0 %v680
        %v1541 = vpop.f32.mrf.mxu0
        %v1542 = vadd.f32 %v1493, %v1541
        %v1543 = vpop.f32.mrf.mxu0
        %v1544 = vadd.f32 %v1495, %v1543
        %1545 = vmatmul.bf16.gmra.mxu0 %v684
        %v1546 = vpop.f32.mrf.mxu0
        %v1547 = vadd.f32 %v1498, %v1546
        %v1548 = vpop.f32.mrf.mxu0
        %v1549 = vadd.f32 %v1500, %v1548
        %1550 = vmatmul.bf16.gmra.mxu0 %v688
        %v1551 = vpop.f32.mrf.mxu0
        %v1552 = vadd.f32 %v1503, %v1551
        %v1553 = vpop.f32.mrf.mxu0
        %v1554 = vadd.f32 %v1505, %v1553
        %1555 = vmatmul.bf16.gmra.mxu0 %v692
        %v1556 = vpop.f32.mrf.mxu0
        %v1557 = vadd.f32 %v1508, %v1556
        %v1558 = vpop.f32.mrf.mxu0
        %v1559 = vadd.f32 %v1510, %v1558
        %1560 = vdwg.mxu0
        %1561 = vmatpush.bf16.msra.mxu0 %v1138
        %1562 = vmatpush.bf16.msra.mxu0 %v1134
        %1563 = vmatpush.bf16.msra.mxu0 %v1130
        %1564 = vmatpush.bf16.msra.mxu0 %v1126
        %1565 = vmatpush.bf16.msra.mxu0 %v1122
        %1566 = vmatpush.bf16.msra.mxu0 %v1118
        %1567 = vmatpush.bf16.msra.mxu0 %v1114
        %1568 = vmatpush.bf16.msra.mxu0 %v1110
        %1569 = vmatmul.bf16.gmra.mxu0 %v661
        %v1570 = vpop.f32.mrf.mxu0
        %v1571 = vadd.f32 0.0, %v1570
        %v1572 = vpop.f32.mrf.mxu0
        %v1573 = vadd.f32 0.0, %v1572
        %1574 = vmatmul.bf16.gmra.mxu0 %v665
        %v1575 = vpop.f32.mrf.mxu0
        %v1576 = vadd.f32 0.0, %v1575
        %v1577 = vpop.f32.mrf.mxu0
        %v1578 = vadd.f32 0.0, %v1577
        %1579 = vmatmul.bf16.gmra.mxu0 %v669
        %v1580 = vpop.f32.mrf.mxu0
        %v1581 = vadd.f32 0.0, %v1580
        %v1582 = vpop.f32.mrf.mxu0
        %v1583 = vadd.f32 0.0, %v1582
        %1584 = vmatmul.bf16.gmra.mxu0 %v673
        %v1585 = vpop.f32.mrf.mxu0
        %v1586 = vadd.f32 0.0, %v1585
        %v1587 = vpop.f32.mrf.mxu0
        %v1588 = vadd.f32 0.0, %v1587
        %1589 = vmatmul.bf16.gmra.mxu0 %v677
        %v1590 = vpop.f32.mrf.mxu0
        %v1591 = vadd.f32 0.0, %v1590
        %v1592 = vpop.f32.mrf.mxu0
        %v1593 = vadd.f32 0.0, %v1592
        %1594 = vmatmul.bf16.gmra.mxu0 %v681
        %v1595 = vpop.f32.mrf.mxu0
        %v1596 = vadd.f32 0.0, %v1595
        %v1597 = vpop.f32.mrf.mxu0
        %v1598 = vadd.f32 0.0, %v1597
        %1599 = vmatmul.bf16.gmra.mxu0 %v685
        %v1600 = vpop.f32.mrf.mxu0
        %v1601 = vadd.f32 0.0, %v1600
        %v1602 = vpop.f32.mrf.mxu0
        %v1603 = vadd.f32 0.0, %v1602
        %1604 = vmatmul.bf16.gmra.mxu0 %v689
        %v1605 = vpop.f32.mrf.mxu0
        %v1606 = vadd.f32 0.0, %v1605
        %v1607 = vpop.f32.mrf.mxu0
        %v1608 = vadd.f32 0.0, %v1607
        %1609 = vdwg.mxu0
        %1610 = vmatpush.bf16.msra.mxu0 %v1170
        %1611 = vmatpush.bf16.msra.mxu0 %v1166
        %1612 = vmatpush.bf16.msra.mxu0 %v1162
        %1613 = vmatpush.bf16.msra.mxu0 %v1158
        %1614 = vmatpush.bf16.msra.mxu0 %v1154
        %1615 = vmatpush.bf16.msra.mxu0 %v1150
        %1616 = vmatpush.bf16.msra.mxu0 %v1146
        %1617 = vmatpush.bf16.msra.mxu0 %v1142
        %1618 = vmatmul.bf16.gmra.mxu0 %v662
        %v1619 = vpop.f32.mrf.mxu0
        %v1620 = vadd.f32 %v1571, %v1619
        %v1621 = vpop.f32.mrf.mxu0
        %v1622 = vadd.f32 %v1573, %v1621
        %1623 = vmatmul.bf16.gmra.mxu0 %v666
        %v1624 = vpop.f32.mrf.mxu0
        %v1625 = vadd.f32 %v1576, %v1624
        %v1626 = vpop.f32.mrf.mxu0
        %v1627 = vadd.f32 %v1578, %v1626
        %1628 = vmatmul.bf16.gmra.mxu0 %v670
        %v1629 = vpop.f32.mrf.mxu0
        %v1630 = vadd.f32 %v1581, %v1629
        %v1631 = vpop.f32.mrf.mxu0
        %v1632 = vadd.f32 %v1583, %v1631
        %1633 = vmatmul.bf16.gmra.mxu0 %v674
        %v1634 = vpop.f32.mrf.mxu0
        %v1635 = vadd.f32 %v1586, %v1634
        %v1636 = vpop.f32.mrf.mxu0
        %v1637 = vadd.f32 %v1588, %v1636
        %1638 = vmatmul.bf16.gmra.mxu0 %v678
        %v1639 = vpop.f32.mrf.mxu0
        %v1640 = vadd.f32 %v1591, %v1639
        %v1641 = vpop.f32.mrf.mxu0
        %v1642 = vadd.f32 %v1593, %v1641
        %1643 = vmatmul.bf16.gmra.mxu0 %v682
        %v1644 = vpop.f32.mrf.mxu0
        %v1645 = vadd.f32 %v1596, %v1644
        %v1646 = vpop.f32.mrf.mxu0
        %v1647 = vadd.f32 %v1598, %v1646
        %1648 = vmatmul.bf16.gmra.mxu0 %v686
        %v1649 = vpop.f32.mrf.mxu0
        %v1650 = vadd.f32 %v1601, %v1649
        %v1651 = vpop.f32.mrf.mxu0
        %v1652 = vadd.f32 %v1603, %v1651
        %1653 = vmatmul.bf16.gmra.mxu0 %v690
        %v1654 = vpop.f32.mrf.mxu0
        %v1655 = vadd.f32 %v1606, %v1654
        %v1656 = vpop.f32.mrf.mxu0
        %v1657 = vadd.f32 %v1608, %v1656
        %1658 = vdwg.mxu0
        %1659 = vmatpush.bf16.msra.mxu0 %v1202
        %1660 = vmatpush.bf16.msra.mxu0 %v1198
        %1661 = vmatpush.bf16.msra.mxu0 %v1194
        %1662 = vmatpush.bf16.msra.mxu0 %v1190
        %1663 = vmatpush.bf16.msra.mxu0 %v1186
        %1664 = vmatpush.bf16.msra.mxu0 %v1182
        %1665 = vmatpush.bf16.msra.mxu0 %v1178
        %1666 = vmatpush.bf16.msra.mxu0 %v1174
        %1667 = vmatmul.bf16.gmra.mxu0 %v663
        %v1668 = vpop.f32.mrf.mxu0
        %v1669 = vadd.f32 %v1620, %v1668
        %v1670 = vpop.f32.mrf.mxu0
        %v1671 = vadd.f32 %v1622, %v1670
        %1672 = vmatmul.bf16.gmra.mxu0 %v667
        %v1673 = vpop.f32.mrf.mxu0
        %v1674 = vadd.f32 %v1625, %v1673
        %v1675 = vpop.f32.mrf.mxu0
        %v1676 = vadd.f32 %v1627, %v1675
        %1677 = vmatmul.bf16.gmra.mxu0 %v671
        %v1678 = vpop.f32.mrf.mxu0
        %v1679 = vadd.f32 %v1630, %v1678
        %v1680 = vpop.f32.mrf.mxu0
        %v1681 = vadd.f32 %v1632, %v1680
        %1682 = vmatmul.bf16.gmra.mxu0 %v675
        %v1683 = vpop.f32.mrf.mxu0
        %v1684 = vadd.f32 %v1635, %v1683
        %v1685 = vpop.f32.mrf.mxu0
        %v1686 = vadd.f32 %v1637, %v1685
        %1687 = vmatmul.bf16.gmra.mxu0 %v679
        %v1688 = vpop.f32.mrf.mxu0
        %v1689 = vadd.f32 %v1640, %v1688
        %v1690 = vpop.f32.mrf.mxu0
        %v1691 = vadd.f32 %v1642, %v1690
        %1692 = vmatmul.bf16.gmra.mxu0 %v683
        %v1693 = vpop.f32.mrf.mxu0
        %v1694 = vadd.f32 %v1645, %v1693
        %v1695 = vpop.f32.mrf.mxu0
        %v1696 = vadd.f32 %v1647, %v1695
        %1697 = vmatmul.bf16.gmra.mxu0 %v687
        %v1698 = vpop.f32.mrf.mxu0
        %v1699 = vadd.f32 %v1650, %v1698
        %v1700 = vpop.f32.mrf.mxu0
        %v1701 = vadd.f32 %v1652, %v1700
        %1702 = vmatmul.bf16.gmra.mxu0 %v691
        %v1703 = vpop.f32.mrf.mxu0
        %v1704 = vadd.f32 %v1655, %v1703
        %v1705 = vpop.f32.mrf.mxu0
        %v1706 = vadd.f32 %v1657, %v1705
        %1707 = vdwg.mxu0
        %1708 = vmatpush.bf16.msra.mxu0 %v1234
        %1709 = vmatpush.bf16.msra.mxu0 %v1230
        %1710 = vmatpush.bf16.msra.mxu0 %v1226
        %1711 = vmatpush.bf16.msra.mxu0 %v1222
        %1712 = vmatpush.bf16.msra.mxu0 %v1218
        %1713 = vmatpush.bf16.msra.mxu0 %v1214
        %1714 = vmatpush.bf16.msra.mxu0 %v1210
        %1715 = vmatpush.bf16.msra.mxu0 %v1206
        %1716 = vmatmul.bf16.gmra.mxu0 %v664
        %v1717 = vpop.f32.mrf.mxu0
        %v1718 = vadd.f32 %v1669, %v1717
        %v1719 = vpop.f32.mrf.mxu0
        %v1720 = vadd.f32 %v1671, %v1719
        %1721 = vmatmul.bf16.gmra.mxu0 %v668
        %v1722 = vpop.f32.mrf.mxu0
        %v1723 = vadd.f32 %v1674, %v1722
        %v1724 = vpop.f32.mrf.mxu0
        %v1725 = vadd.f32 %v1676, %v1724
        %1726 = vmatmul.bf16.gmra.mxu0 %v672
        %v1727 = vpop.f32.mrf.mxu0
        %v1728 = vadd.f32 %v1679, %v1727
        %v1729 = vpop.f32.mrf.mxu0
        %v1730 = vadd.f32 %v1681, %v1729
        %1731 = vmatmul.bf16.gmra.mxu0 %v676
        %v1732 = vpop.f32.mrf.mxu0
        %v1733 = vadd.f32 %v1684, %v1732
        %v1734 = vpop.f32.mrf.mxu0
        %v1735 = vadd.f32 %v1686, %v1734
        %1736 = vmatmul.bf16.gmra.mxu0 %v680
        %v1737 = vpop.f32.mrf.mxu0
        %v1738 = vadd.f32 %v1689, %v1737
        %v1739 = vpop.f32.mrf.mxu0
        %v1740 = vadd.f32 %v1691, %v1739
        %1741 = vmatmul.bf16.gmra.mxu0 %v684
        %v1742 = vpop.f32.mrf.mxu0
        %v1743 = vadd.f32 %v1694, %v1742
        %v1744 = vpop.f32.mrf.mxu0
        %v1745 = vadd.f32 %v1696, %v1744
        %1746 = vmatmul.bf16.gmra.mxu0 %v688
        %v1747 = vpop.f32.mrf.mxu0
        %v1748 = vadd.f32 %v1699, %v1747
        %v1749 = vpop.f32.mrf.mxu0
        %v1750 = vadd.f32 %v1701, %v1749
        %1751 = vmatmul.bf16.gmra.mxu0 %v692
        %v1752 = vpop.f32.mrf.mxu0
        %v1753 = vadd.f32 %v1704, %v1752
        %v1754 = vpop.f32.mrf.mxu0
        %v1755 = vadd.f32 %v1706, %v1754
        %1756 = vdwg.mxu0
        %1757 = vmatpush.bf16.msra.mxu0 %v1139
        %1758 = vmatpush.bf16.msra.mxu0 %v1135
        %1759 = vmatpush.bf16.msra.mxu0 %v1131
        %1760 = vmatpush.bf16.msra.mxu0 %v1127
        %1761 = vmatpush.bf16.msra.mxu0 %v1123
        %1762 = vmatpush.bf16.msra.mxu0 %v1119
        %1763 = vmatpush.bf16.msra.mxu0 %v1115
        %1764 = vmatpush.bf16.msra.mxu0 %v1111
        %1765 = vmatmul.bf16.gmra.mxu0 %v661
        %v1766 = vpop.f32.mrf.mxu0
        %v1767 = vadd.f32 0.0, %v1766
        %v1768 = vpop.f32.mrf.mxu0
        %v1769 = vadd.f32 0.0, %v1768
        %1770 = vmatmul.bf16.gmra.mxu0 %v665
        %v1771 = vpop.f32.mrf.mxu0
        %v1772 = vadd.f32 0.0, %v1771
        %v1773 = vpop.f32.mrf.mxu0
        %v1774 = vadd.f32 0.0, %v1773
        %1775 = vmatmul.bf16.gmra.mxu0 %v669
        %v1776 = vpop.f32.mrf.mxu0
        %v1777 = vadd.f32 0.0, %v1776
        %v1778 = vpop.f32.mrf.mxu0
        %v1779 = vadd.f32 0.0, %v1778
        %1780 = vmatmul.bf16.gmra.mxu0 %v673
        %v1781 = vpop.f32.mrf.mxu0
        %v1782 = vadd.f32 0.0, %v1781
        %v1783 = vpop.f32.mrf.mxu0
        %v1784 = vadd.f32 0.0, %v1783
        %1785 = vmatmul.bf16.gmra.mxu0 %v677
        %v1786 = vpop.f32.mrf.mxu0
        %v1787 = vadd.f32 0.0, %v1786
        %v1788 = vpop.f32.mrf.mxu0
        %v1789 = vadd.f32 0.0, %v1788
        %1790 = vmatmul.bf16.gmra.mxu0 %v681
        %v1791 = vpop.f32.mrf.mxu0
        %v1792 = vadd.f32 0.0, %v1791
        %v1793 = vpop.f32.mrf.mxu0
        %v1794 = vadd.f32 0.0, %v1793
        %1795 = vmatmul.bf16.gmra.mxu0 %v685
        %v1796 = vpop.f32.mrf.mxu0
        %v1797 = vadd.f32 0.0, %v1796
        %v1798 = vpop.f32.mrf.mxu0
        %v1799 = vadd.f32 0.0, %v1798
        %1800 = vmatmul.bf16.gmra.mxu0 %v689
        %v1801 = vpop.f32.mrf.mxu0
        %v1802 = vadd.f32 0.0, %v1801
        %v1803 = vpop.f32.mrf.mxu0
        %v1804 = vadd.f32 0.0, %v1803
        %1805 = vdwg.mxu0
        %1806 = vmatpush.bf16.msra.mxu0 %v1171
        %1807 = vmatpush.bf16.msra.mxu0 %v1167
        %1808 = vmatpush.bf16.msra.mxu0 %v1163
        %1809 = vmatpush.bf16.msra.mxu0 %v1159
        %1810 = vmatpush.bf16.msra.mxu0 %v1155
        %1811 = vmatpush.bf16.msra.mxu0 %v1151
        %1812 = vmatpush.bf16.msra.mxu0 %v1147
        %1813 = vmatpush.bf16.msra.mxu0 %v1143
        %1814 = vmatmul.bf16.gmra.mxu0 %v662
        %v1815 = vpop.f32.mrf.mxu0
        %v1816 = vadd.f32 %v1767, %v1815
        %v1817 = vpop.f32.mrf.mxu0
        %v1818 = vadd.f32 %v1769, %v1817
        %1819 = vmatmul.bf16.gmra.mxu0 %v666
        %v1820 = vpop.f32.mrf.mxu0
        %v1821 = vadd.f32 %v1772, %v1820
        %v1822 = vpop.f32.mrf.mxu0
        %v1823 = vadd.f32 %v1774, %v1822
        %1824 = vmatmul.bf16.gmra.mxu0 %v670
        %v1825 = vpop.f32.mrf.mxu0
        %v1826 = vadd.f32 %v1777, %v1825
        %v1827 = vpop.f32.mrf.mxu0
        %v1828 = vadd.f32 %v1779, %v1827
        %1829 = vmatmul.bf16.gmra.mxu0 %v674
        %v1830 = vpop.f32.mrf.mxu0
        %v1831 = vadd.f32 %v1782, %v1830
        %v1832 = vpop.f32.mrf.mxu0
        %v1833 = vadd.f32 %v1784, %v1832
        %1834 = vmatmul.bf16.gmra.mxu0 %v678
        %v1835 = vpop.f32.mrf.mxu0
        %v1836 = vadd.f32 %v1787, %v1835
        %v1837 = vpop.f32.mrf.mxu0
        %v1838 = vadd.f32 %v1789, %v1837
        %1839 = vmatmul.bf16.gmra.mxu0 %v682
        %v1840 = vpop.f32.mrf.mxu0
        %v1841 = vadd.f32 %v1792, %v1840
        %v1842 = vpop.f32.mrf.mxu0
        %v1843 = vadd.f32 %v1794, %v1842
        %1844 = vmatmul.bf16.gmra.mxu0 %v686
        %v1845 = vpop.f32.mrf.mxu0
        %v1846 = vadd.f32 %v1797, %v1845
        %v1847 = vpop.f32.mrf.mxu0
        %v1848 = vadd.f32 %v1799, %v1847
        %1849 = vmatmul.bf16.gmra.mxu0 %v690
        %v1850 = vpop.f32.mrf.mxu0
        %v1851 = vadd.f32 %v1802, %v1850
        %v1852 = vpop.f32.mrf.mxu0
        %v1853 = vadd.f32 %v1804, %v1852
        %1854 = vdwg.mxu0
        %1855 = vmatpush.bf16.msra.mxu0 %v1203
        %1856 = vmatpush.bf16.msra.mxu0 %v1199
        %1857 = vmatpush.bf16.msra.mxu0 %v1195
        %1858 = vmatpush.bf16.msra.mxu0 %v1191
        %1859 = vmatpush.bf16.msra.mxu0 %v1187
        %1860 = vmatpush.bf16.msra.mxu0 %v1183
        %1861 = vmatpush.bf16.msra.mxu0 %v1179
        %1862 = vmatpush.bf16.msra.mxu0 %v1175
        %1863 = vmatmul.bf16.gmra.mxu0 %v663
        %v1864 = vpop.f32.mrf.mxu0
        %v1865 = vadd.f32 %v1816, %v1864
        %v1866 = vpop.f32.mrf.mxu0
        %v1867 = vadd.f32 %v1818, %v1866
        %1868 = vmatmul.bf16.gmra.mxu0 %v667
        %v1869 = vpop.f32.mrf.mxu0
        %v1870 = vadd.f32 %v1821, %v1869
        %v1871 = vpop.f32.mrf.mxu0
        %v1872 = vadd.f32 %v1823, %v1871
        %1873 = vmatmul.bf16.gmra.mxu0 %v671
        %v1874 = vpop.f32.mrf.mxu0
        %v1875 = vadd.f32 %v1826, %v1874
        %v1876 = vpop.f32.mrf.mxu0
        %v1877 = vadd.f32 %v1828, %v1876
        %1878 = vmatmul.bf16.gmra.mxu0 %v675
        %v1879 = vpop.f32.mrf.mxu0
        %v1880 = vadd.f32 %v1831, %v1879
        %v1881 = vpop.f32.mrf.mxu0
        %v1882 = vadd.f32 %v1833, %v1881
        %1883 = vmatmul.bf16.gmra.mxu0 %v679
        %v1884 = vpop.f32.mrf.mxu0
        %v1885 = vadd.f32 %v1836, %v1884
        %v1886 = vpop.f32.mrf.mxu0
        %v1887 = vadd.f32 %v1838, %v1886
        %1888 = vmatmul.bf16.gmra.mxu0 %v683
        %v1889 = vpop.f32.mrf.mxu0
        %v1890 = vadd.f32 %v1841, %v1889
        %v1891 = vpop.f32.mrf.mxu0
        %v1892 = vadd.f32 %v1843, %v1891
        %1893 = vmatmul.bf16.gmra.mxu0 %v687
        %v1894 = vpop.f32.mrf.mxu0
        %v1895 = vadd.f32 %v1846, %v1894
        %v1896 = vpop.f32.mrf.mxu0
        %v1897 = vadd.f32 %v1848, %v1896
        %1898 = vmatmul.bf16.gmra.mxu0 %v691
        %v1899 = vpop.f32.mrf.mxu0
        %v1900 = vadd.f32 %v1851, %v1899
        %v1901 = vpop.f32.mrf.mxu0
        %v1902 = vadd.f32 %v1853, %v1901
        %1903 = vdwg.mxu0
        %1904 = vmatpush.bf16.msra.mxu0 %v1235
        %1905 = vmatpush.bf16.msra.mxu0 %v1231
        %1906 = vmatpush.bf16.msra.mxu0 %v1227
        %1907 = vmatpush.bf16.msra.mxu0 %v1223
        %1908 = vmatpush.bf16.msra.mxu0 %v1219
        %1909 = vmatpush.bf16.msra.mxu0 %v1215
        %1910 = vmatpush.bf16.msra.mxu0 %v1211
        %1911 = vmatpush.bf16.msra.mxu0 %v1207
        %1912 = vmatmul.bf16.gmra.mxu0 %v664
        %v1913 = vpop.f32.mrf.mxu0
        %v1914 = vadd.f32 %v1865, %v1913
        %v1915 = vpop.f32.mrf.mxu0
        %v1916 = vadd.f32 %v1867, %v1915
        %1917 = vmatmul.bf16.gmra.mxu0 %v668
        %v1918 = vpop.f32.mrf.mxu0
        %v1919 = vadd.f32 %v1870, %v1918
        %v1920 = vpop.f32.mrf.mxu0
        %v1921 = vadd.f32 %v1872, %v1920
        %1922 = vmatmul.bf16.gmra.mxu0 %v672
        %v1923 = vpop.f32.mrf.mxu0
        %v1924 = vadd.f32 %v1875, %v1923
        %v1925 = vpop.f32.mrf.mxu0
        %v1926 = vadd.f32 %v1877, %v1925
        %1927 = vmatmul.bf16.gmra.mxu0 %v676
        %v1928 = vpop.f32.mrf.mxu0
        %v1929 = vadd.f32 %v1880, %v1928
        %v1930 = vpop.f32.mrf.mxu0
        %v1931 = vadd.f32 %v1882, %v1930
        %1932 = vmatmul.bf16.gmra.mxu0 %v680
        %v1933 = vpop.f32.mrf.mxu0
        %v1934 = vadd.f32 %v1885, %v1933
        %v1935 = vpop.f32.mrf.mxu0
        %v1936 = vadd.f32 %v1887, %v1935
        %1937 = vmatmul.bf16.gmra.mxu0 %v684
        %v1938 = vpop.f32.mrf.mxu0
        %v1939 = vadd.f32 %v1890, %v1938
        %v1940 = vpop.f32.mrf.mxu0
        %v1941 = vadd.f32 %v1892, %v1940
        %1942 = vmatmul.bf16.gmra.mxu0 %v688
        %v1943 = vpop.f32.mrf.mxu0
        %v1944 = vadd.f32 %v1895, %v1943
        %v1945 = vpop.f32.mrf.mxu0
        %v1946 = vadd.f32 %v1897, %v1945
        %1947 = vmatmul.bf16.gmra.mxu0 %v692
        %v1948 = vpop.f32.mrf.mxu0
        %v1949 = vadd.f32 %v1900, %v1948
        %v1950 = vpop.f32.mrf.mxu0
        %v1951 = vadd.f32 %v1902, %v1950
        %1952 = vdwg.mxu0
        %1953 = vmatpush.bf16.msra.mxu0 %v1140
        %1954 = vmatpush.bf16.msra.mxu0 %v1136
        %1955 = vmatpush.bf16.msra.mxu0 %v1132
        %1956 = vmatpush.bf16.msra.mxu0 %v1128
        %1957 = vmatpush.bf16.msra.mxu0 %v1124
        %1958 = vmatpush.bf16.msra.mxu0 %v1120
        %1959 = vmatpush.bf16.msra.mxu0 %v1116
        %1960 = vmatpush.bf16.msra.mxu0 %v1112
        %1961 = vmatmul.bf16.gmra.mxu0 %v661
        %v1962 = vpop.f32.mrf.mxu0
        %v1963 = vadd.f32 0.0, %v1962
        %v1964 = vpop.f32.mrf.mxu0
        %v1965 = vadd.f32 0.0, %v1964
        %1966 = vmatmul.bf16.gmra.mxu0 %v665
        %v1967 = vpop.f32.mrf.mxu0
        %v1968 = vadd.f32 0.0, %v1967
        %v1969 = vpop.f32.mrf.mxu0
        %v1970 = vadd.f32 0.0, %v1969
        %1971 = vmatmul.bf16.gmra.mxu0 %v669
        %v1972 = vpop.f32.mrf.mxu0
        %v1973 = vadd.f32 0.0, %v1972
        %v1974 = vpop.f32.mrf.mxu0
        %v1975 = vadd.f32 0.0, %v1974
        %1976 = vmatmul.bf16.gmra.mxu0 %v673
        %v1977 = vpop.f32.mrf.mxu0
        %v1978 = vadd.f32 0.0, %v1977
        %v1979 = vpop.f32.mrf.mxu0
        %v1980 = vadd.f32 0.0, %v1979
        %1981 = vmatmul.bf16.gmra.mxu0 %v677
        %v1982 = vpop.f32.mrf.mxu0
        %v1983 = vadd.f32 0.0, %v1982
        %v1984 = vpop.f32.mrf.mxu0
        %v1985 = vadd.f32 0.0, %v1984
        %1986 = vmatmul.bf16.gmra.mxu0 %v681
        %v1987 = vpop.f32.mrf.mxu0
        %v1988 = vadd.f32 0.0, %v1987
        %v1989 = vpop.f32.mrf.mxu0
        %v1990 = vadd.f32 0.0, %v1989
        %1991 = vmatmul.bf16.gmra.mxu0 %v685
        %v1992 = vpop.f32.mrf.mxu0
        %v1993 = vadd.f32 0.0, %v1992
        %v1994 = vpop.f32.mrf.mxu0
        %v1995 = vadd.f32 0.0, %v1994
        %1996 = vmatmul.bf16.gmra.mxu0 %v689
        %v1997 = vpop.f32.mrf.mxu0
        %v1998 = vadd.f32 0.0, %v1997
        %v1999 = vpop.f32.mrf.mxu0
        %v2000 = vadd.f32 0.0, %v1999
        %2001 = vdwg.mxu0
        %2002 = vmatpush.bf16.msra.mxu0 %v1172
        %2003 = vmatpush.bf16.msra.mxu0 %v1168
        %2004 = vmatpush.bf16.msra.mxu0 %v1164
        %2005 = vmatpush.bf16.msra.mxu0 %v1160
        %2006 = vmatpush.bf16.msra.mxu0 %v1156
        %2007 = vmatpush.bf16.msra.mxu0 %v1152
        %2008 = vmatpush.bf16.msra.mxu0 %v1148
        %2009 = vmatpush.bf16.msra.mxu0 %v1144
        %2010 = vmatmul.bf16.gmra.mxu0 %v662
        %v2011 = vpop.f32.mrf.mxu0
        %v2012 = vadd.f32 %v1963, %v2011
        %v2013 = vpop.f32.mrf.mxu0
        %v2014 = vadd.f32 %v1965, %v2013
        %2015 = vmatmul.bf16.gmra.mxu0 %v666
        %v2016 = vpop.f32.mrf.mxu0
        %v2017 = vadd.f32 %v1968, %v2016
        %v2018 = vpop.f32.mrf.mxu0
        %v2019 = vadd.f32 %v1970, %v2018
        %2020 = vmatmul.bf16.gmra.mxu0 %v670
        %v2021 = vpop.f32.mrf.mxu0
        %v2022 = vadd.f32 %v1973, %v2021
        %v2023 = vpop.f32.mrf.mxu0
        %v2024 = vadd.f32 %v1975, %v2023
        %2025 = vmatmul.bf16.gmra.mxu0 %v674
        %v2026 = vpop.f32.mrf.mxu0
        %v2027 = vadd.f32 %v1978, %v2026
        %v2028 = vpop.f32.mrf.mxu0
        %v2029 = vadd.f32 %v1980, %v2028
        %2030 = vmatmul.bf16.gmra.mxu0 %v678
        %v2031 = vpop.f32.mrf.mxu0
        %v2032 = vadd.f32 %v1983, %v2031
        %v2033 = vpop.f32.mrf.mxu0
        %v2034 = vadd.f32 %v1985, %v2033
        %2035 = vmatmul.bf16.gmra.mxu0 %v682
        %v2036 = vpop.f32.mrf.mxu0
        %v2037 = vadd.f32 %v1988, %v2036
        %v2038 = vpop.f32.mrf.mxu0
        %v2039 = vadd.f32 %v1990, %v2038
        %2040 = vmatmul.bf16.gmra.mxu0 %v686
        %v2041 = vpop.f32.mrf.mxu0
        %v2042 = vadd.f32 %v1993, %v2041
        %v2043 = vpop.f32.mrf.mxu0
        %v2044 = vadd.f32 %v1995, %v2043
        %2045 = vmatmul.bf16.gmra.mxu0 %v690
        %v2046 = vpop.f32.mrf.mxu0
        %v2047 = vadd.f32 %v1998, %v2046
        %v2048 = vpop.f32.mrf.mxu0
        %v2049 = vadd.f32 %v2000, %v2048
        %2050 = vdwg.mxu0
        %2051 = vmatpush.bf16.msra.mxu0 %v1204
        %2052 = vmatpush.bf16.msra.mxu0 %v1200
        %2053 = vmatpush.bf16.msra.mxu0 %v1196
        %2054 = vmatpush.bf16.msra.mxu0 %v1192
        %2055 = vmatpush.bf16.msra.mxu0 %v1188
        %2056 = vmatpush.bf16.msra.mxu0 %v1184
        %2057 = vmatpush.bf16.msra.mxu0 %v1180
        %2058 = vmatpush.bf16.msra.mxu0 %v1176
        %2059 = vmatmul.bf16.gmra.mxu0 %v663
        %v2060 = vpop.f32.mrf.mxu0
        %v2061 = vadd.f32 %v2012, %v2060
        %v2062 = vpop.f32.mrf.mxu0
        %v2063 = vadd.f32 %v2014, %v2062
        %2064 = vmatmul.bf16.gmra.mxu0 %v667
        %v2065 = vpop.f32.mrf.mxu0
        %v2066 = vadd.f32 %v2017, %v2065
        %v2067 = vpop.f32.mrf.mxu0
        %v2068 = vadd.f32 %v2019, %v2067
        %2069 = vmatmul.bf16.gmra.mxu0 %v671
        %v2070 = vpop.f32.mrf.mxu0
        %v2071 = vadd.f32 %v2022, %v2070
        %v2072 = vpop.f32.mrf.mxu0
        %v2073 = vadd.f32 %v2024, %v2072
        %2074 = vmatmul.bf16.gmra.mxu0 %v675
        %v2075 = vpop.f32.mrf.mxu0
        %v2076 = vadd.f32 %v2027, %v2075
        %v2077 = vpop.f32.mrf.mxu0
        %v2078 = vadd.f32 %v2029, %v2077
        %2079 = vmatmul.bf16.gmra.mxu0 %v679
        %v2080 = vpop.f32.mrf.mxu0
        %v2081 = vadd.f32 %v2032, %v2080
        %v2082 = vpop.f32.mrf.mxu0
        %v2083 = vadd.f32 %v2034, %v2082
        %2084 = vmatmul.bf16.gmra.mxu0 %v683
        %v2085 = vpop.f32.mrf.mxu0
        %v2086 = vadd.f32 %v2037, %v2085
        %v2087 = vpop.f32.mrf.mxu0
        %v2088 = vadd.f32 %v2039, %v2087
        %2089 = vmatmul.bf16.gmra.mxu0 %v687
        %v2090 = vpop.f32.mrf.mxu0
        %v2091 = vadd.f32 %v2042, %v2090
        %v2092 = vpop.f32.mrf.mxu0
        %v2093 = vadd.f32 %v2044, %v2092
        %2094 = vmatmul.bf16.gmra.mxu0 %v691
        %v2095 = vpop.f32.mrf.mxu0
        %v2096 = vadd.f32 %v2047, %v2095
        %v2097 = vpop.f32.mrf.mxu0
        %v2098 = vadd.f32 %v2049, %v2097
        %2099 = vdwg.mxu0
        %2100 = vmatpush.bf16.msra.mxu0 %v1236
        %2101 = vmatpush.bf16.msra.mxu0 %v1232
        %2102 = vmatpush.bf16.msra.mxu0 %v1228
        %2103 = vmatpush.bf16.msra.mxu0 %v1224
        %2104 = vmatpush.bf16.msra.mxu0 %v1220
        %2105 = vmatpush.bf16.msra.mxu0 %v1216
        %2106 = vmatpush.bf16.msra.mxu0 %v1212
        %2107 = vmatpush.bf16.msra.mxu0 %v1208
        %2108 = vmatmul.bf16.gmra.mxu0 %v664
        %v2109 = vpop.f32.mrf.mxu0
        %v2110 = vadd.f32 %v2061, %v2109
        %v2111 = vpop.f32.mrf.mxu0
        %v2112 = vadd.f32 %v2063, %v2111
        %2113 = vmatmul.bf16.gmra.mxu0 %v668
        %v2114 = vpop.f32.mrf.mxu0
        %v2115 = vadd.f32 %v2066, %v2114
        %v2116 = vpop.f32.mrf.mxu0
        %v2117 = vadd.f32 %v2068, %v2116
        %2118 = vmatmul.bf16.gmra.mxu0 %v672
        %v2119 = vpop.f32.mrf.mxu0
        %v2120 = vadd.f32 %v2071, %v2119
        %v2121 = vpop.f32.mrf.mxu0
        %v2122 = vadd.f32 %v2073, %v2121
        %2123 = vmatmul.bf16.gmra.mxu0 %v676
        %v2124 = vpop.f32.mrf.mxu0
        %v2125 = vadd.f32 %v2076, %v2124
        %v2126 = vpop.f32.mrf.mxu0
        %v2127 = vadd.f32 %v2078, %v2126
        %2128 = vmatmul.bf16.gmra.mxu0 %v680
        %v2129 = vpop.f32.mrf.mxu0
        %v2130 = vadd.f32 %v2081, %v2129
        %v2131 = vpop.f32.mrf.mxu0
        %v2132 = vadd.f32 %v2083, %v2131
        %2133 = vmatmul.bf16.gmra.mxu0 %v684
        %v2134 = vpop.f32.mrf.mxu0
        %v2135 = vadd.f32 %v2086, %v2134
        %v2136 = vpop.f32.mrf.mxu0
        %v2137 = vadd.f32 %v2088, %v2136
        %2138 = vmatmul.bf16.gmra.mxu0 %v688
        %v2139 = vpop.f32.mrf.mxu0
        %v2140 = vadd.f32 %v2091, %v2139
        %v2141 = vpop.f32.mrf.mxu0
        %v2142 = vadd.f32 %v2093, %v2141
        %2143 = vmatmul.bf16.gmra.mxu0 %v692
        %v2144 = vpop.f32.mrf.mxu0
        %v2145 = vadd.f32 %v2096, %v2144
        %v2146 = vpop.f32.mrf.mxu0
        %v2147 = vadd.f32 %v2098, %v2146
        %2148 = vdwg.mxu0
        %v2149 = vadd.f32 %v341, %v1522
        %v2150 = vadd.f32 %v342, %v1718
        %v2151 = vadd.f32 %v343, %v1914
        %v2152 = vadd.f32 %v344, %v2110
        %v2153 = vadd.f32 %v345, %v1524
        %v2154 = vadd.f32 %v346, %v1720
        %v2155 = vadd.f32 %v347, %v1916
        %v2156 = vadd.f32 %v348, %v2112
        %v2157 = vadd.f32 %v349, %v1527
        %v2158 = vadd.f32 %v350, %v1723
        %v2159 = vadd.f32 %v351, %v1919
        %v2160 = vadd.f32 %v352, %v2115
        %v2161 = vadd.f32 %v353, %v1529
        %v2162 = vadd.f32 %v354, %v1725
        %v2163 = vadd.f32 %v355, %v1921
        %v2164 = vadd.f32 %v356, %v2117
        %v2165 = vadd.f32 %v357, %v1532
        %v2166 = vadd.f32 %v358, %v1728
        %v2167 = vadd.f32 %v359, %v1924
        %v2168 = vadd.f32 %v360, %v2120
        %v2169 = vadd.f32 %v361, %v1534
        %v2170 = vadd.f32 %v362, %v1730
        %v2171 = vadd.f32 %v363, %v1926
        %v2172 = vadd.f32 %v364, %v2122
        %v2173 = vadd.f32 %v365, %v1537
        %v2174 = vadd.f32 %v366, %v1733
        %v2175 = vadd.f32 %v367, %v1929
        %v2176 = vadd.f32 %v368, %v2125
        %v2177 = vadd.f32 %v369, %v1539
        %v2178 = vadd.f32 %v370, %v1735
        %v2179 = vadd.f32 %v371, %v1931
        %v2180 = vadd.f32 %v372, %v2127
        %v2181 = vadd.f32 %v373, %v1542
        %v2182 = vadd.f32 %v374, %v1738
        %v2183 = vadd.f32 %v375, %v1934
        %v2184 = vadd.f32 %v376, %v2130
        %v2185 = vadd.f32 %v377, %v1544
        %v2186 = vadd.f32 %v378, %v1740
        %v2187 = vadd.f32 %v379, %v1936
        %v2188 = vadd.f32 %v380, %v2132
        %v2189 = vadd.f32 %v381, %v1547
        %v2190 = vadd.f32 %v382, %v1743
        %v2191 = vadd.f32 %v383, %v1939
        %v2192 = vadd.f32 %v384, %v2135
        %v2193 = vadd.f32 %v385, %v1549
        %v2194 = vadd.f32 %v386, %v1745
        %v2195 = vadd.f32 %v387, %v1941
        %v2196 = vadd.f32 %v388, %v2137
        %v2197 = vadd.f32 %v389, %v1552
        %v2198 = vadd.f32 %v390, %v1748
        %v2199 = vadd.f32 %v391, %v1944
        %v2200 = vadd.f32 %v392, %v2140
        %v2201 = vadd.f32 %v393, %v1554
        %v2202 = vadd.f32 %v394, %v1750
        %v2203 = vadd.f32 %v395, %v1946
        %v2204 = vadd.f32 %v396, %v2142
        %v2205 = vadd.f32 %v397, %v1557
        %v2206 = vadd.f32 %v398, %v1753
        %v2207 = vadd.f32 %v399, %v1949
        %v2208 = vadd.f32 %v400, %v2145
        %v2209 = vadd.f32 %v401, %v1559
        %v2210 = vadd.f32 %v402, %v1755
        %v2211 = vadd.f32 %v403, %v1951
        %v2212 = vadd.f32 %v404, %v2147
        %2213 = vst [vmem:[%s241] sm:$0xff] %v2149
        %2214 = vst [vmem:[%s241 + $0x8] sm:$0xff] %v2150
        %2215 = vst [vmem:[%s241 + $0x10] sm:$0xff] %v2151
        %2216 = vst [vmem:[%s241 + $0x18] sm:$0xff] %v2152
        %2217 = vst [vmem:[%s241 + $0x20] sm:$0xff] %v2153
        %2218 = vst [vmem:[%s241 + $0x28] sm:$0xff] %v2154
        %2219 = vst [vmem:[%s241 + $0x30] sm:$0xff] %v2155
        %2220 = vst [vmem:[%s241 + $0x38] sm:$0xff] %v2156
        %2221 = vst [vmem:[%s241 + $0x40] sm:$0xff] %v2157
        %2222 = vst [vmem:[%s241 + $0x48] sm:$0xff] %v2158
        %2223 = vst [vmem:[%s241 + $0x50] sm:$0xff] %v2159
        %2224 = vst [vmem:[%s241 + $0x58] sm:$0xff] %v2160
        %2225 = vst [vmem:[%s241 + $0x60] sm:$0xff] %v2161
        %2226 = vst [vmem:[%s241 + $0x68] sm:$0xff] %v2162
        %2227 = vst [vmem:[%s241 + $0x70] sm:$0xff] %v2163
        %2228 = vst [vmem:[%s241 + $0x78] sm:$0xff] %v2164
        %2229 = vst [vmem:[%s241 + $0x80] sm:$0xff] %v2165
        %2230 = vst [vmem:[%s241 + $0x88] sm:$0xff] %v2166
        %2231 = vst [vmem:[%s241 + $0x90] sm:$0xff] %v2167
        %2232 = vst [vmem:[%s241 + $0x98] sm:$0xff] %v2168
        %2233 = vst [vmem:[%s241 + $0xa0] sm:$0xff] %v2169
        %2234 = vst [vmem:[%s241 + $0xa8] sm:$0xff] %v2170
        %2235 = vst [vmem:[%s241 + $0xb0] sm:$0xff] %v2171
        %2236 = vst [vmem:[%s241 + $0xb8] sm:$0xff] %v2172
        %2237 = vst [vmem:[%s241 + $0xc0] sm:$0xff] %v2173
        %2238 = vst [vmem:[%s241 + $0xc8] sm:$0xff] %v2174
        %2239 = vst [vmem:[%s241 + $0xd0] sm:$0xff] %v2175
        %2240 = vst [vmem:[%s241 + $0xd8] sm:$0xff] %v2176
        %2241 = vst [vmem:[%s241 + $0xe0] sm:$0xff] %v2177
        %2242 = vst [vmem:[%s241 + $0xe8] sm:$0xff] %v2178
        %2243 = vst [vmem:[%s241 + $0xf0] sm:$0xff] %v2179
        %2244 = vst [vmem:[%s241 + $0xf8] sm:$0xff] %v2180
        %2245 = vst [vmem:[%s241 + $0x100] sm:$0xff] %v2181
        %2246 = vst [vmem:[%s241 + $0x108] sm:$0xff] %v2182
        %2247 = vst [vmem:[%s241 + $0x110] sm:$0xff] %v2183
        %2248 = vst [vmem:[%s241 + $0x118] sm:$0xff] %v2184
        %2249 = vst [vmem:[%s241 + $0x120] sm:$0xff] %v2185
        %2250 = vst [vmem:[%s241 + $0x128] sm:$0xff] %v2186
        %2251 = vst [vmem:[%s241 + $0x130] sm:$0xff] %v2187
        %2252 = vst [vmem:[%s241 + $0x138] sm:$0xff] %v2188
        %2253 = vst [vmem:[%s241 + $0x140] sm:$0xff] %v2189
        %2254 = vst [vmem:[%s241 + $0x148] sm:$0xff] %v2190
        %2255 = vst [vmem:[%s241 + $0x150] sm:$0xff] %v2191
        %2256 = vst [vmem:[%s241 + $0x158] sm:$0xff] %v2192
        %2257 = vst [vmem:[%s241 + $0x160] sm:$0xff] %v2193
        %2258 = vst [vmem:[%s241 + $0x168] sm:$0xff] %v2194
        %2259 = vst [vmem:[%s241 + $0x170] sm:$0xff] %v2195
        %2260 = vst [vmem:[%s241 + $0x178] sm:$0xff] %v2196
        %2261 = vst [vmem:[%s241 + $0x180] sm:$0xff] %v2197
        %2262 = vst [vmem:[%s241 + $0x188] sm:$0xff] %v2198
        %2263 = vst [vmem:[%s241 + $0x190] sm:$0xff] %v2199
        %2264 = vst [vmem:[%s241 + $0x198] sm:$0xff] %v2200
        %2265 = vst [vmem:[%s241 + $0x1a0] sm:$0xff] %v2201
        %2266 = vst [vmem:[%s241 + $0x1a8] sm:$0xff] %v2202
        %2267 = vst [vmem:[%s241 + $0x1b0] sm:$0xff] %v2203
        %2268 = vst [vmem:[%s241 + $0x1b8] sm:$0xff] %v2204
        %2269 = vst [vmem:[%s241 + $0x1c0] sm:$0xff] %v2205
        %2270 = vst [vmem:[%s241 + $0x1c8] sm:$0xff] %v2206
        %2271 = vst [vmem:[%s241 + $0x1d0] sm:$0xff] %v2207
        %2272 = vst [vmem:[%s241 + $0x1d8] sm:$0xff] %v2208
        %2273 = vst [vmem:[%s241 + $0x1e0] sm:$0xff] %v2209
        %2274 = vst [vmem:[%s241 + $0x1e8] sm:$0xff] %v2210
        %2275 = vst [vmem:[%s241 + $0x1f0] sm:$0xff] %v2211
        %2276 = vst [vmem:[%s241 + $0x1f8] sm:$0xff] %v2212
        // Predicated region
        $region37: #{fwd.1} parent=31 // pred_check
          %p2277 = pneg %p273
        $region38: #{fwd.1} parent=31 // pred_check_branch
          %2279 = sbr.rel (%p2277) target = $region40
        $region39: #{fwd.1} parent=31 // pred_region
          %v2280 = vld [vmem:[%s241] sm:$0xff]
          %v2281 = vld [vmem:[%s241 + $0x8] sm:$0xff]
          %v2282 = vld [vmem:[%s241 + $0x10] sm:$0xff]
          %v2283 = vld [vmem:[%s241 + $0x18] sm:$0xff]
          %v2284 = vld [vmem:[%s241 + $0x20] sm:$0xff]
          %v2285 = vld [vmem:[%s241 + $0x28] sm:$0xff]
          %v2286 = vld [vmem:[%s241 + $0x30] sm:$0xff]
          %v2287 = vld [vmem:[%s241 + $0x38] sm:$0xff]
          %v2288 = vld [vmem:[%s241 + $0x40] sm:$0xff]
          %v2289 = vld [vmem:[%s241 + $0x48] sm:$0xff]
          %v2290 = vld [vmem:[%s241 + $0x50] sm:$0xff]
          %v2291 = vld [vmem:[%s241 + $0x58] sm:$0xff]
          %v2292 = vld [vmem:[%s241 + $0x60] sm:$0xff]
          %v2293 = vld [vmem:[%s241 + $0x68] sm:$0xff]
          %v2294 = vld [vmem:[%s241 + $0x70] sm:$0xff]
          %v2295 = vld [vmem:[%s241 + $0x78] sm:$0xff]
          %v2296 = vld [vmem:[%s241 + $0x80] sm:$0xff]
          %v2297 = vld [vmem:[%s241 + $0x88] sm:$0xff]
          %v2298 = vld [vmem:[%s241 + $0x90] sm:$0xff]
          %v2299 = vld [vmem:[%s241 + $0x98] sm:$0xff]
          %v2300 = vld [vmem:[%s241 + $0xa0] sm:$0xff]
          %v2301 = vld [vmem:[%s241 + $0xa8] sm:$0xff]
          %v2302 = vld [vmem:[%s241 + $0xb0] sm:$0xff]
          %v2303 = vld [vmem:[%s241 + $0xb8] sm:$0xff]
          %v2304 = vld [vmem:[%s241 + $0xc0] sm:$0xff]
          %v2305 = vld [vmem:[%s241 + $0xc8] sm:$0xff]
          %v2306 = vld [vmem:[%s241 + $0xd0] sm:$0xff]
          %v2307 = vld [vmem:[%s241 + $0xd8] sm:$0xff]
          %v2308 = vld [vmem:[%s241 + $0xe0] sm:$0xff]
          %v2309 = vld [vmem:[%s241 + $0xe8] sm:$0xff]
          %v2310 = vld [vmem:[%s241 + $0xf0] sm:$0xff]
          %v2311 = vld [vmem:[%s241 + $0xf8] sm:$0xff]
          %v2312 = vld [vmem:[%s241 + $0x100] sm:$0xff]
          %v2313 = vld [vmem:[%s241 + $0x108] sm:$0xff]
          %v2314 = vld [vmem:[%s241 + $0x110] sm:$0xff]
          %v2315 = vld [vmem:[%s241 + $0x118] sm:$0xff]
          %v2316 = vld [vmem:[%s241 + $0x120] sm:$0xff]
          %v2317 = vld [vmem:[%s241 + $0x128] sm:$0xff]
          %v2318 = vld [vmem:[%s241 + $0x130] sm:$0xff]
          %v2319 = vld [vmem:[%s241 + $0x138] sm:$0xff]
          %v2320 = vld [vmem:[%s241 + $0x140] sm:$0xff]
          %v2321 = vld [vmem:[%s241 + $0x148] sm:$0xff]
          %v2322 = vld [vmem:[%s241 + $0x150] sm:$0xff]
          %v2323 = vld [vmem:[%s241 + $0x158] sm:$0xff]
          %v2324 = vld [vmem:[%s241 + $0x160] sm:$0xff]
          %v2325 = vld [vmem:[%s241 + $0x168] sm:$0xff]
          %v2326 = vld [vmem:[%s241 + $0x170] sm:$0xff]
          %v2327 = vld [vmem:[%s241 + $0x178] sm:$0xff]
          %v2328 = vld [vmem:[%s241 + $0x180] sm:$0xff]
          %v2329 = vld [vmem:[%s241 + $0x188] sm:$0xff]
          %v2330 = vld [vmem:[%s241 + $0x190] sm:$0xff]
          %v2331 = vld [vmem:[%s241 + $0x198] sm:$0xff]
          %v2332 = vld [vmem:[%s241 + $0x1a0] sm:$0xff]
          %v2333 = vld [vmem:[%s241 + $0x1a8] sm:$0xff]
          %v2334 = vld [vmem:[%s241 + $0x1b0] sm:$0xff]
          %v2335 = vld [vmem:[%s241 + $0x1b8] sm:$0xff]
          %v2336 = vld [vmem:[%s241 + $0x1c0] sm:$0xff]
          %v2337 = vld [vmem:[%s241 + $0x1c8] sm:$0xff]
          %v2338 = vld [vmem:[%s241 + $0x1d0] sm:$0xff]
          %v2339 = vld [vmem:[%s241 + $0x1d8] sm:$0xff]
          %v2340 = vld [vmem:[%s241 + $0x1e0] sm:$0xff]
          %v2341 = vld [vmem:[%s241 + $0x1e8] sm:$0xff]
          %v2342 = vld [vmem:[%s241 + $0x1f0] sm:$0xff]
          %v2343 = vld [vmem:[%s241 + $0x1f8] sm:$0xff]
          %v2344 = vld [vmem:[%s269] sm:$0xf]
          %v2346 = vperm.slane %v2344, 0
          %v2347 = vperm.slane %v2344, 1
          %v2348 = vperm.slane %v2344, 2
          %v2349 = vperm.slane %v2344, 3
          %v2354 = vadd.f32 %v2280, %v2346
          %v2355 = vadd.f32 %v2281, %v2347
          %v2356 = vadd.f32 %v2282, %v2348
          %v2357 = vadd.f32 %v2283, %v2349
          %v2358 = vadd.f32 %v2284, %v2346
          %v2359 = vadd.f32 %v2285, %v2347
          %v2360 = vadd.f32 %v2286, %v2348
          %v2361 = vadd.f32 %v2287, %v2349
          %v2362 = vadd.f32 %v2288, %v2346
          %v2363 = vadd.f32 %v2289, %v2347
          %v2364 = vadd.f32 %v2290, %v2348
          %v2365 = vadd.f32 %v2291, %v2349
          %v2366 = vadd.f32 %v2292, %v2346
          %v2367 = vadd.f32 %v2293, %v2347
          %v2368 = vadd.f32 %v2294, %v2348
          %v2369 = vadd.f32 %v2295, %v2349
          %v2370 = vadd.f32 %v2296, %v2346
          %v2371 = vadd.f32 %v2297, %v2347
          %v2372 = vadd.f32 %v2298, %v2348
          %v2373 = vadd.f32 %v2299, %v2349
          %v2374 = vadd.f32 %v2300, %v2346
          %v2375 = vadd.f32 %v2301, %v2347
          %v2376 = vadd.f32 %v2302, %v2348
          %v2377 = vadd.f32 %v2303, %v2349
          %v2378 = vadd.f32 %v2304, %v2346
          %v2379 = vadd.f32 %v2305, %v2347
          %v2380 = vadd.f32 %v2306, %v2348
          %v2381 = vadd.f32 %v2307, %v2349
          %v2382 = vadd.f32 %v2308, %v2346
          %v2383 = vadd.f32 %v2309, %v2347
          %v2384 = vadd.f32 %v2310, %v2348
          %v2385 = vadd.f32 %v2311, %v2349
          %v2386 = vadd.f32 %v2312, %v2346
          %v2387 = vadd.f32 %v2313, %v2347
          %v2388 = vadd.f32 %v2314, %v2348
          %v2389 = vadd.f32 %v2315, %v2349
          %v2390 = vadd.f32 %v2316, %v2346
          %v2391 = vadd.f32 %v2317, %v2347
          %v2392 = vadd.f32 %v2318, %v2348
          %v2393 = vadd.f32 %v2319, %v2349
          %v2394 = vadd.f32 %v2320, %v2346
          %v2395 = vadd.f32 %v2321, %v2347
          %v2396 = vadd.f32 %v2322, %v2348
          %v2397 = vadd.f32 %v2323, %v2349
          %v2398 = vadd.f32 %v2324, %v2346
          %v2399 = vadd.f32 %v2325, %v2347
          %v2400 = vadd.f32 %v2326, %v2348
          %v2401 = vadd.f32 %v2327, %v2349
          %v2402 = vadd.f32 %v2328, %v2346
          %v2403 = vadd.f32 %v2329, %v2347
          %v2404 = vadd.f32 %v2330, %v2348
          %v2405 = vadd.f32 %v2331, %v2349
          %v2406 = vadd.f32 %v2332, %v2346
          %v2407 = vadd.f32 %v2333, %v2347
          %v2408 = vadd.f32 %v2334, %v2348
          %v2409 = vadd.f32 %v2335, %v2349
          %v2410 = vadd.f32 %v2336, %v2346
          %v2411 = vadd.f32 %v2337, %v2347
          %v2412 = vadd.f32 %v2338, %v2348
          %v2413 = vadd.f32 %v2339, %v2349
          %v2414 = vadd.f32 %v2340, %v2346
          %v2415 = vadd.f32 %v2341, %v2347
          %v2416 = vadd.f32 %v2342, %v2348
          %v2417 = vadd.f32 %v2343, %v2349
          %2418 = vst [vmem:[%s241] sm:$0xff] %v2354
          %2419 = vst [vmem:[%s241 + $0x8] sm:$0xff] %v2355
          %2420 = vst [vmem:[%s241 + $0x10] sm:$0xff] %v2356
          %2421 = vst [vmem:[%s241 + $0x18] sm:$0xff] %v2357
          %2422 = vst [vmem:[%s241 + $0x20] sm:$0xff] %v2358
          %2423 = vst [vmem:[%s241 + $0x28] sm:$0xff] %v2359
          %2424 = vst [vmem:[%s241 + $0x30] sm:$0xff] %v2360
          %2425 = vst [vmem:[%s241 + $0x38] sm:$0xff] %v2361
          %2426 = vst [vmem:[%s241 + $0x40] sm:$0xff] %v2362
          %2427 = vst [vmem:[%s241 + $0x48] sm:$0xff] %v2363
          %2428 = vst [vmem:[%s241 + $0x50] sm:$0xff] %v2364
          %2429 = vst [vmem:[%s241 + $0x58] sm:$0xff] %v2365
          %2430 = vst [vmem:[%s241 + $0x60] sm:$0xff] %v2366
          %2431 = vst [vmem:[%s241 + $0x68] sm:$0xff] %v2367
          %2432 = vst [vmem:[%s241 + $0x70] sm:$0xff] %v2368
          %2433 = vst [vmem:[%s241 + $0x78] sm:$0xff] %v2369
          %2434 = vst [vmem:[%s241 + $0x80] sm:$0xff] %v2370
          %2435 = vst [vmem:[%s241 + $0x88] sm:$0xff] %v2371
          %2436 = vst [vmem:[%s241 + $0x90] sm:$0xff] %v2372
          %2437 = vst [vmem:[%s241 + $0x98] sm:$0xff] %v2373
          %2438 = vst [vmem:[%s241 + $0xa0] sm:$0xff] %v2374
          %2439 = vst [vmem:[%s241 + $0xa8] sm:$0xff] %v2375
          %2440 = vst [vmem:[%s241 + $0xb0] sm:$0xff] %v2376
          %2441 = vst [vmem:[%s241 + $0xb8] sm:$0xff] %v2377
          %2442 = vst [vmem:[%s241 + $0xc0] sm:$0xff] %v2378
          %2443 = vst [vmem:[%s241 + $0xc8] sm:$0xff] %v2379
          %2444 = vst [vmem:[%s241 + $0xd0] sm:$0xff] %v2380
          %2445 = vst [vmem:[%s241 + $0xd8] sm:$0xff] %v2381
          %2446 = vst [vmem:[%s241 + $0xe0] sm:$0xff] %v2382
          %2447 = vst [vmem:[%s241 + $0xe8] sm:$0xff] %v2383
          %2448 = vst [vmem:[%s241 + $0xf0] sm:$0xff] %v2384
          %2449 = vst [vmem:[%s241 + $0xf8] sm:$0xff] %v2385
          %2450 = vst [vmem:[%s241 + $0x100] sm:$0xff] %v2386
          %2451 = vst [vmem:[%s241 + $0x108] sm:$0xff] %v2387
          %2452 = vst [vmem:[%s241 + $0x110] sm:$0xff] %v2388
          %2453 = vst [vmem:[%s241 + $0x118] sm:$0xff] %v2389
          %2454 = vst [vmem:[%s241 + $0x120] sm:$0xff] %v2390
          %2455 = vst [vmem:[%s241 + $0x128] sm:$0xff] %v2391
          %2456 = vst [vmem:[%s241 + $0x130] sm:$0xff] %v2392
          %2457 = vst [vmem:[%s241 + $0x138] sm:$0xff] %v2393
          %2458 = vst [vmem:[%s241 + $0x140] sm:$0xff] %v2394
          %2459 = vst [vmem:[%s241 + $0x148] sm:$0xff] %v2395
          %2460 = vst [vmem:[%s241 + $0x150] sm:$0xff] %v2396
          %2461 = vst [vmem:[%s241 + $0x158] sm:$0xff] %v2397
          %2462 = vst [vmem:[%s241 + $0x160] sm:$0xff] %v2398
          %2463 = vst [vmem:[%s241 + $0x168] sm:$0xff] %v2399
          %2464 = vst [vmem:[%s241 + $0x170] sm:$0xff] %v2400
          %2465 = vst [vmem:[%s241 + $0x178] sm:$0xff] %v2401
          %2466 = vst [vmem:[%s241 + $0x180] sm:$0xff] %v2402
          %2467 = vst [vmem:[%s241 + $0x188] sm:$0xff] %v2403
          %2468 = vst [vmem:[%s241 + $0x190] sm:$0xff] %v2404
          %2469 = vst [vmem:[%s241 + $0x198] sm:$0xff] %v2405
          %2470 = vst [vmem:[%s241 + $0x1a0] sm:$0xff] %v2406
          %2471 = vst [vmem:[%s241 + $0x1a8] sm:$0xff] %v2407
          %2472 = vst [vmem:[%s241 + $0x1b0] sm:$0xff] %v2408
          %2473 = vst [vmem:[%s241 + $0x1b8] sm:$0xff] %v2409
          %2474 = vst [vmem:[%s241 + $0x1c0] sm:$0xff] %v2410
          %2475 = vst [vmem:[%s241 + $0x1c8] sm:$0xff] %v2411
          %2476 = vst [vmem:[%s241 + $0x1d0] sm:$0xff] %v2412
          %2477 = vst [vmem:[%s241 + $0x1d8] sm:$0xff] %v2413
          %2478 = vst [vmem:[%s241 + $0x1e0] sm:$0xff] %v2414
          %2479 = vst [vmem:[%s241 + $0x1e8] sm:$0xff] %v2415
          %2480 = vst [vmem:[%s241 + $0x1f0] sm:$0xff] %v2416
          %2481 = vst [vmem:[%s241 + $0x1f8] sm:$0xff] %v2417
        $region40: #{fwd.1} parent=31 // pred_fallthru
          _
        %s2482 = sand.u32 %s128, 1
        %s2483 = scalar_lea.sflag [#allocation3], %s2482
        %s2484 = sand.u32 %s128, 1
        %s2485 = smul.addr %s2484, 512
        %s2486 = scalar_lea.vmem [#allocation2], %s2485
        // Predicated region
        $region41: #{fwd.1} parent=31 // pred_check
          %p2487 = pneg %p138
        $region42: #{fwd.1} parent=31 // pred_check_branch
          %2489 = sbr.rel (%p2487) target = $region44
        $region43: #{fwd.1} parent=31 // pred_region
          %s2490 = smul.u32 16, %s22
          %s2491 = smul.u32 4, %s23
          %2493 = vsyncadd %s2483, 0
          %s2494 = smul.addr %s2490, 4
          %s2495 = sadd.s32 %s2491, %s2494
          %s2496 = smul.addr %s2495, 8
          %s2497 = scalar_lea.hbm %s3, %s2496
          %s2498 = sshll.u32 %s2486, 4
          %s2499 = int_to_ptr.vmem [resolvable:$true] %s2498
          %s2500 = sshll.u32 %s2497, 4
          %s2501 = int_to_ptr.hbm [resolvable:$true] %s2500
          %2506 = dma.vmem_to_hbm [thread:$0]  %s2499, 8192, %s2501, %s2483, 512, 512, 32
        $region44: #{fwd.1} parent=31 // pred_fallthru
          _
      $region32: #{fwd.1} parent=5 // pred_fallthru
        _
      %p2507 = scmp.le.s32.totalorder 2, %s12
      // Predicated region
      $region45: #{fwd.1} parent=5 // pred_check
        %p2508 = pneg %p2507
      $region46: #{fwd.1} parent=5 // pred_check_branch
        %2510 = sbr.rel (%p2508) target = $region48
      $region47: #{fwd.1} parent=5 // pred_region
        %s2511 = ssub.s32 %s12, 2
        // Predicated region
        $region49: #{fwd.1} parent=47 // pred_check
          %p2512 = pneg %p144
        $region50: #{fwd.1} parent=47 // pred_check_branch
          %2514 = sbr.rel (%p2512) target = $region52
        $region51: #{fwd.1} parent=47 // pred_region
          %s2515 = sand.u32 %s129, 1
          %s2516 = scalar_lea.sflag [#allocation3], %s2515
          %s2517 = sand.u32 %s129, 1
          %s2518 = smul.addr %s2517, 512
          %s2519 = scalar_lea.vmem [#allocation2], %s2518
          %2521 = dma.done %s2516, 8192
        $region52: #{fwd.1} parent=47 // pred_fallthru
          _
      $region48: #{fwd.1} parent=5 // pred_fallthru
        _
    $region6: #{fwd.1} parent=1 // loop_footer
      %s16 = sadd.s32 1, %s12
    $region7: #{fwd.1} parent=1 // loop_footer_branch
      %11 = sbr.rel target = $region3
    $region8: #{fwd.1} parent=1 // loop_exit
      _
    %2522 = vsyncpa [#allocation3], 1
    %s2523 = scalar_lea.sflag [#allocation3], 1
    %2524 = vsyncpa %s2523, 1

</llo_original>
